<compile_context>
chip_gen: v5e
topology: v5e:2x2
jax: 0.10.0
libtpu: 0.0.40
codegen_flags: <defaults>
</compile_context>

<pallas_src>
import functools

import jax
import jax.numpy as jnp
from jax import lax
from jax.experimental import pallas as pl
from jax.experimental.pallas import tpu as pltpu

# ----- model config (consistent with the module's __init__) -----
N_EMBD = 32          # c.n_embd
N_HIDDEN = 8         # c.n_hidden  -> FFN hidden = 4 * n_hidden = 32
HIDDEN = 4 * N_HIDDEN
NUM_HEAD = 4
HEAD_SIZE = N_EMBD // NUM_HEAD
BLOCK_SIZE = 8       # c.block_size (== T here)
LN_EPS = 1e-5


def _layernorm(v, gamma, beta):
    # PyTorch nn.LayerNorm: biased variance, eps inside sqrt. Always f32.
    mu = jnp.mean(v, axis=-1, keepdims=True)
    var = jnp.mean((v - mu) ** 2, axis=-1, keepdims=True)
    return (v - mu) * lax.rsqrt(var + LN_EPS) * gamma + beta


def block_kernel(x_ref,
                 ln1_g_ref, ln1_b_ref,
                 wqkv_ref, wproj_ref, bproj_ref,
                 ln2_g_ref, ln2_b_ref,
                 w1_ref, b1_ref, w2_ref, b2_ref,
                 y_ref, attn_ref,
                 *, num_head):
    Bblk, T, C = x_ref.shape
    H = num_head
    hs = C // H
    N = Bblk * T                      # tokens processed this grid step
    scale = float(hs) ** -0.5         # k.shape[-1] ** -0.5

    # ---- load a whole batch block and flatten tokens for the dense matmuls ----
    x = x_ref[...].reshape(N, C)      # (N, C), f32

    # ---- ln1 ----
    ln1x = _layernorm(x, ln1_g_ref[...], ln1_b_ref[...])

    # ---- fused QKV projection: one matmul for all heads, q|k|v ----
    qkv = jnp.dot(ln1x.astype(wqkv_ref.dtype), wqkv_ref[...],
                  preferred_element_type=jnp.float32)            # (N, 3C)

    # ---- causal additive mask, built once per grid step (finite -> NaN-safe) ----
    row = lax.broadcasted_iota(jnp.int32, (T, T), 0)
    col = lax.broadcasted_iota(jnp.int32, (T, T), 1)
    mask_bias = jnp.where(col <= row, jnp.float32(0.0), jnp.float32(-1e30))
    mask_bias = mask_bias[None, :, :]                              # (1, T, T)

    # ---- per-head attention, batched over the Bblk axis via 3-D einsums ----
    attn_list = []
    sa = jnp.zeros((N, C), jnp.float32)
    for h in range(H):
        q = qkv[:, h * hs:(h + 1) * hs].reshape(Bblk, T, hs)
        k = qkv[:, C + h * hs:C + (h + 1) * hs].reshape(Bblk, T, hs)
        v = qkv[:, 2 * C + h * hs:2 * C + (h + 1) * hs].reshape(Bblk, T, hs)

        s = jnp.einsum('bqd,bkd->bqk', q, k,
                       preferred_element_type=jnp.float32) * scale + mask_bias
        s = s - jnp.max(s, axis=-1, keepdims=True)
        p = jnp.exp(s)
        w = p * pl.reciprocal(jnp.sum(p, axis=-1, keepdims=True), approx=True)
        attn_list.append(w)                                        # (Bblk, T, T)

        o = jnp.einsum('bqk,bkd->bqd', w, v,
                       preferred_element_type=jnp.float32)         # (Bblk, T, hs)
        # fold the output projection per head: identical to concat(heads) @ Wproj,
        # but avoids the lane-axis concatenate entirely.
        sa = sa + jnp.dot(o.reshape(N, hs).astype(wproj_ref.dtype),
                          wproj_ref[h * hs:(h + 1) * hs, :],
                          preferred_element_type=jnp.float32)

    sa = sa + bproj_ref[...]

    # ---- residual 1 ----
    x1 = x + sa

    # ---- ln2 + feed-forward ----
    ln2x = _layernorm(x1, ln2_g_ref[...], ln2_b_ref[...])
    h1 = jnp.dot(ln2x.astype(w1_ref.dtype), w1_ref[...],
                 preferred_element_type=jnp.float32) + b1_ref[...]
    h1 = jnp.maximum(h1, 0.0)                                      # ReLU
    ff = jnp.dot(h1.astype(w2_ref.dtype), w2_ref[...],
                 preferred_element_type=jnp.float32) + b2_ref[...]

    # ---- residual 2 + single stores ----
    y_ref[...] = (x1 + ff).reshape(Bblk, T, C).astype(y_ref.dtype)
    attn_ref[...] = jnp.stack(attn_list, axis=1)                   # (Bblk, H, T, T), one store


def _pack_qkv(wq, wk, wv):
    # per-head weights (H, C, hs) -> fused (C, 3C), columns ordered [q heads | k heads | v heads]
    def flat(w):
        return jnp.transpose(w, (1, 0, 2)).reshape(w.shape[1], -1)
    return jnp.concatenate([flat(wq), flat(wk), flat(wv)], axis=1)


def _choose_batch_block(B, T, target_tokens=256):
    # Fill the MXU row dimension (target ~256 tokens per step) but keep the parallel grid
    # length >= 2 when possible so both v7x TensorCores get work (v5e/v6e have one TC).
    bblk = max(1, min(B, target_tokens // max(T, 1)))
    if B >= 2:
        bblk = min(bblk, B // 2)
    bblk = max(bblk, 1)
    while B % bblk != 0:
        bblk -= 1
    return bblk


def transformer_block(x, params, *, batch_block=None, compute_dtype=None):
    B, T, C = x.shape
    H, _, hs = params["wq"].shape
    hidden = params["w1"].shape[1]

    bblk = batch_block if batch_block is not None else _choose_batch_block(B, T)
    assert B % bblk == 0

    wqkv = _pack_qkv(params["wq"], params["wk"], params["wv"])     # (C, 3C)
    wproj, w1, w2 = params["wproj"], params["w1"], params["w2"]
    if compute_dtype is not None:
        # bf16 weight path for v6e/v7x MXUs; LN/softmax/residual stay f32 in-kernel.
        wqkv, wproj = wqkv.astype(compute_dtype), wproj.astype(compute_dtype)
        w1, w2 = w1.astype(compute_dtype), w2.astype(compute_dtype)

    def full(shape):
        return pl.BlockSpec(shape, lambda b, _s=shape: (0,) * len(_s))

    in_specs = [
        pl.BlockSpec((bblk, T, C), lambda b: (b, 0, 0)),   # x (batch block)
        full((1, C)), full((1, C)),                        # ln1 gamma/beta
        full((C, 3 * C)),                                  # fused Wqkv
        full((C, C)), full((1, C)),                        # proj W, b
        full((1, C)), full((1, C)),                        # ln2 gamma/beta
        full((C, hidden)), full((1, hidden)),              # ffn W1, b1
        full((hidden, C)), full((1, C)),                   # ffn W2, b2
    ]
    out_specs = [
        pl.BlockSpec((bblk, T, C), lambda b: (b, 0, 0)),           # y
        pl.BlockSpec((bblk, H, T, T), lambda b: (b, 0, 0, 0)),     # attention maps
    ]
    out_shape = [
        jax.ShapeDtypeStruct((B, T, C), x.dtype),
        jax.ShapeDtypeStruct((B, H, T, T), jnp.float32),
    ]

    return pl.pallas_call(
        functools.partial(block_kernel, num_head=H),
        grid=(B // bblk,),
        in_specs=in_specs,
        out_specs=out_specs,
        out_shape=out_shape,
        compiler_params=pltpu.CompilerParams(
            dimension_semantics=("parallel",)),
    )(x,
      params["ln1_g"], params["ln1_b"],
      wqkv,
      wproj, params["bproj"],
      params["ln2_g"], params["ln2_b"],
      w1, params["b1"], w2, params["b2"])


# ----- pure-JAX reference (mirrors the PyTorch forward) -----
def block_reference(x, p):
    def ln(v, g, b):
        mu = jnp.mean(v, axis=-1, keepdims=True)
        var = jnp.mean((v - mu) ** 2, axis=-1, keepdims=True)
        return (v - mu) / jnp.sqrt(var + LN_EPS) * g + b

    B, T, C = x.shape
    H, _, hs = p["wq"].shape
    ln1x = ln(x, p["ln1_g"][0], p["ln1_b"][0])
    tril = jnp.tril(jnp.ones((T, T), jnp.bool_))
    outs, maps = [], []
    for h in range(H):
        q = ln1x @ p["wq"][h]
        k = ln1x @ p["wk"][h]
        v = ln1x @ p["wv"][h]
        w = (q @ jnp.swapaxes(k, -2, -1)) * (hs ** -0.5)
        w = jnp.where(tril, w, -jnp.inf)
        w = jax.nn.softmax(w, axis=-1)
        maps.append(w)
        outs.append(w @ v)
    sa = jnp.concatenate(outs, axis=-1) @ p["wproj"] + p["bproj"][0]
    x1 = x + sa
    ln2x = ln(x1, p["ln2_g"][0], p["ln2_b"][0])
    ff = jnp.maximum(ln2x @ p["w1"] + p["b1"][0], 0.0) @ p["w2"] + p["b2"][0]
    return x1 + ff, jnp.stack(maps, axis=1)


def init_params(key):
    ks = jax.random.split(key, 8)
    s = 0.02
    return {
        "ln1_g": jnp.ones((1, N_EMBD), jnp.float32),
        "ln1_b": jnp.zeros((1, N_EMBD), jnp.float32),
        "wq": s * jax.random.normal(ks[0], (NUM_HEAD, N_EMBD, HEAD_SIZE), jnp.float32),
        "wk": s * jax.random.normal(ks[1], (NUM_HEAD, N_EMBD, HEAD_SIZE), jnp.float32),
        "wv": s * jax.random.normal(ks[2], (NUM_HEAD, N_EMBD, HEAD_SIZE), jnp.float32),
        "wproj": s * jax.random.normal(ks[3], (N_EMBD, N_EMBD), jnp.float32),
        "bproj": s * jax.random.normal(ks[4], (1, N_EMBD), jnp.float32),
        "ln2_g": jnp.ones((1, N_EMBD), jnp.float32),
        "ln2_b": jnp.zeros((1, N_EMBD), jnp.float32),
        "w1": s * jax.random.normal(ks[5], (N_EMBD, HIDDEN), jnp.float32),
        "b1": s * jax.random.normal(ks[6], (1, HIDDEN), jnp.float32),
        "w2": s * jax.random.normal(ks[7], (HIDDEN, N_EMBD), jnp.float32),
        "b2": jnp.zeros((1, N_EMBD), jnp.float32),
    }


if __name__ == "__main__":
    key = jax.random.PRNGKey(0)
    kx, kp = jax.random.split(key)
    B, T = 8, BLOCK_SIZE                       # -> Bblk=4, grid=(2,) (keeps 2 TCs busy on v7x)
    x = jax.random.normal(kx, (B, T, N_EMBD), jnp.float32)
    params = init_params(kp)

    y, attn = transformer_block(x, params)     # f32 compute (matches the PyTorch module)
    y = jax.block_until_ready(y)
    attn = jax.block_until_ready(attn)

    y_ref, attn_ref = block_reference(x, params)
    assert jnp.allclose(y, y_ref, atol=1e-4, rtol=1e-4), "output mismatch"
    # attention uses pl.reciprocal(approx=True); allow a slightly looser tolerance
    assert jnp.allclose(attn, attn_ref, atol=1e-3, rtol=1e-3), "attention map mismatch"

    print("KERNEL_OK")
</pallas_src>

<mosaic_0001>
module attributes {stable_mosaic.version = 11 : i64} {
  func.func @block_kernel(%arg0: i32, %arg1: memref<4x8x32xf32, #tpu.memory_space<vmem>>, %arg2: memref<1x32xf32, #tpu.memory_space<vmem>>, %arg3: memref<1x32xf32, #tpu.memory_space<vmem>>, %arg4: memref<32x96xf32, #tpu.memory_space<vmem>>, %arg5: memref<32x32xf32, #tpu.memory_space<vmem>>, %arg6: memref<1x32xf32, #tpu.memory_space<vmem>>, %arg7: memref<1x32xf32, #tpu.memory_space<vmem>>, %arg8: memref<1x32xf32, #tpu.memory_space<vmem>>, %arg9: memref<32x32xf32, #tpu.memory_space<vmem>>, %arg10: memref<1x32xf32, #tpu.memory_space<vmem>>, %arg11: memref<32x32xf32, #tpu.memory_space<vmem>>, %arg12: memref<1x32xf32, #tpu.memory_space<vmem>>, %arg13: memref<4x8x32xf32, #tpu.memory_space<vmem>>, %arg14: memref<4x4x8x8xf32, #tpu.memory_space<vmem>>) attributes {dimension_semantics = [#tpu.dimension_semantics<parallel>], iteration_bounds = array<i64: 2>, scalar_prefetch = 0 : i64, scratch_operands = 0 : i64, tpu.core_type = #tpu.core_type<tc>, window_params = [{transform_indices = @transform_0, window_bounds = array<i64: 4, 8, 32>}, {pipeline_mode = #tpu.pipeline_mode<synchronous>, transform_indices = @transform_1, window_bounds = array<i64: 1, 32>}, {pipeline_mode = #tpu.pipeline_mode<synchronous>, transform_indices = @transform_2, window_bounds = array<i64: 1, 32>}, {pipeline_mode = #tpu.pipeline_mode<synchronous>, transform_indices = @transform_3, window_bounds = array<i64: 32, 96>}, {pipeline_mode = #tpu.pipeline_mode<synchronous>, transform_indices = @transform_4, window_bounds = array<i64: 32, 32>}, {pipeline_mode = #tpu.pipeline_mode<synchronous>, transform_indices = @transform_5, window_bounds = array<i64: 1, 32>}, {pipeline_mode = #tpu.pipeline_mode<synchronous>, transform_indices = @transform_6, window_bounds = array<i64: 1, 32>}, {pipeline_mode = #tpu.pipeline_mode<synchronous>, transform_indices = @transform_7, window_bounds = array<i64: 1, 32>}, {pipeline_mode = #tpu.pipeline_mode<synchronous>, transform_indices = @transform_8, window_bounds = array<i64: 32, 32>}, {pipeline_mode = #tpu.pipeline_mode<synchronous>, transform_indices = @transform_9, window_bounds = array<i64: 1, 32>}, {pipeline_mode = #tpu.pipeline_mode<synchronous>, transform_indices = @transform_10, window_bounds = array<i64: 32, 32>}, {pipeline_mode = #tpu.pipeline_mode<synchronous>, transform_indices = @transform_11, window_bounds = array<i64: 1, 32>}, {transform_indices = @transform_12, window_bounds = array<i64: 4, 8, 32>}, {transform_indices = @transform_13, window_bounds = array<i64: 4, 4, 8, 8>}]} {
    %c0 = arith.constant 0 : index
    %c0_0 = arith.constant 0 : index
    %c0_1 = arith.constant 0 : index
    %0 = vector.load %arg1[%c0, %c0_0, %c0_1] : memref<4x8x32xf32, #tpu.memory_space<vmem>>, vector<4x8x32xf32>
    %1 = vector.shape_cast %0 : vector<4x8x32xf32> to vector<32x32xf32>
    %c0_2 = arith.constant 0 : index
    %c0_3 = arith.constant 0 : index
    %2 = vector.load %arg2[%c0_2, %c0_3] : memref<1x32xf32, #tpu.memory_space<vmem>>, vector<1x32xf32>
    %c0_4 = arith.constant 0 : index
    %c0_5 = arith.constant 0 : index
    %3 = vector.load %arg3[%c0_4, %c0_5] : memref<1x32xf32, #tpu.memory_space<vmem>>, vector<1x32xf32>
    %cst = arith.constant dense<0.000000e+00> : vector<32xf32>
    %4 = vector.multi_reduction <add>, %1, %cst [1] : vector<32x32xf32> to vector<32xf32>
    %5 = vector.shape_cast %4 : vector<32xf32> to vector<32x1xf32>
    %cst_6 = arith.constant 3.200000e+01 : f32
    %6 = vector.broadcast %cst_6 : f32 to vector<32x1xf32>
    %7 = arith.divf %5, %6 : vector<32x1xf32>
    %8 = vector.broadcast %7 : vector<32x1xf32> to vector<32x32xf32>
    %9 = arith.subf %1, %8 : vector<32x32xf32>
    %10 = arith.mulf %9, %9 : vector<32x32xf32>
    %cst_7 = arith.constant dense<0.000000e+00> : vector<32xf32>
    %11 = vector.multi_reduction <add>, %10, %cst_7 [1] : vector<32x32xf32> to vector<32xf32>
    %12 = vector.shape_cast %11 : vector<32xf32> to vector<32x1xf32>
    %cst_8 = arith.constant 3.200000e+01 : f32
    %13 = vector.broadcast %cst_8 : f32 to vector<32x1xf32>
    %14 = arith.divf %12, %13 : vector<32x1xf32>
    %15 = vector.broadcast %7 : vector<32x1xf32> to vector<32x32xf32>
    %16 = arith.subf %1, %15 : vector<32x32xf32>
    %cst_9 = arith.constant 9.99999974E-6 : f32
    %17 = vector.broadcast %cst_9 : f32 to vector<32x1xf32>
    %18 = arith.addf %14, %17 : vector<32x1xf32>
    %19 = math.rsqrt %18 : vector<32x1xf32>
    %20 = vector.broadcast %19 : vector<32x1xf32> to vector<32x32xf32>
    %21 = arith.mulf %16, %20 : vector<32x32xf32>
    %22 = vector.broadcast %2 : vector<1x32xf32> to vector<32x32xf32>
    %23 = arith.mulf %21, %22 : vector<32x32xf32>
    %24 = vector.broadcast %3 : vector<1x32xf32> to vector<32x32xf32>
    %25 = arith.addf %23, %24 : vector<32x32xf32>
    %c0_10 = arith.constant 0 : index
    %c0_11 = arith.constant 0 : index
    %26 = vector.load %arg4[%c0_10, %c0_11] : memref<32x96xf32, #tpu.memory_space<vmem>>, vector<32x96xf32>
    %cst_12 = arith.constant dense<0.000000e+00> : vector<32x96xf32>
    %27 = tpu.matmul %25, %26, %cst_12 {dimension_numbers = #tpu.dot_dimension_numbers<[1], [0], [0], [1], [0, 0, 1, 1], [], []>} : vector<32x32xf32>, vector<32x96xf32>, vector<32x96xf32> -> vector<32x96xf32>
    %28 = tpu.iota {dimensions = array<i32: 0>} : vector<8x8xi32>
    %29 = tpu.iota {dimensions = array<i32: 1>} : vector<8x8xi32>
    %30 = arith.cmpi sle, %29, %28 : vector<8x8xi32>
    %cst_13 = arith.constant 0.000000e+00 : f32
    %cst_14 = arith.constant -1.000000e+30 : f32
    %31 = vector.broadcast %cst_13 : f32 to vector<8x8xf32>
    %32 = vector.broadcast %cst_14 : f32 to vector<8x8xf32>
    %33 = arith.select %30, %31, %32 : vector<8x8xi1>, vector<8x8xf32>
    %34 = vector.shape_cast %33 : vector<8x8xf32> to vector<1x8x8xf32>
    %cst_15 = arith.constant 0.000000e+00 : f32
    %35 = vector.broadcast %cst_15 : f32 to vector<32x32xf32>
    %36 = vector.extract_strided_slice %27 {offsets = [0, 0], sizes = [32, 8], strides = [1, 1]} : vector<32x96xf32> to vector<32x8xf32>
    %37 = vector.shape_cast %36 : vector<32x8xf32> to vector<4x8x8xf32>
    %38 = vector.extract_strided_slice %27 {offsets = [0, 32], sizes = [32, 8], strides = [1, 1]} : vector<32x96xf32> to vector<32x8xf32>
    %39 = vector.shape_cast %38 : vector<32x8xf32> to vector<4x8x8xf32>
    %40 = vector.extract_strided_slice %27 {offsets = [0, 64], sizes = [32, 8], strides = [1, 1]} : vector<32x96xf32> to vector<32x8xf32>
    %41 = vector.shape_cast %40 : vector<32x8xf32> to vector<4x8x8xf32>
    "tpu.trace_start"() <{level = 10 : i32, message = "bqd,bkd->bqk"}> : () -> ()
    %cst_16 = arith.constant dense<0.000000e+00> : vector<4x8x8xf32>
    %42 = tpu.matmul %37, %39, %cst_16 {dimension_numbers = #tpu.dot_dimension_numbers<[2], [2], [1], [1], [0, 0, 0, 1, 1, 1], [0], [0]>} : vector<4x8x8xf32>, vector<4x8x8xf32>, vector<4x8x8xf32> -> vector<4x8x8xf32>
    "tpu.trace_stop"() : () -> ()
    %cst_17 = arith.constant 0.353553385 : f32
    %43 = vector.broadcast %cst_17 : f32 to vector<4x8x8xf32>
    %44 = arith.mulf %42, %43 : vector<4x8x8xf32>
    %45 = vector.broadcast %34 : vector<1x8x8xf32> to vector<4x8x8xf32>
    %46 = arith.addf %44, %45 : vector<4x8x8xf32>
    %cst_18 = arith.constant dense<0xFF800000> : vector<4x8xf32>
    %47 = vector.multi_reduction <maximumf>, %46, %cst_18 [2] : vector<4x8x8xf32> to vector<4x8xf32>
    %48 = vector.shape_cast %47 : vector<4x8xf32> to vector<4x8x1xf32>
    %49 = vector.broadcast %48 : vector<4x8x1xf32> to vector<4x8x8xf32>
    %50 = arith.subf %46, %49 : vector<4x8x8xf32>
    %51 = math.exp %50 : vector<4x8x8xf32>
    %cst_19 = arith.constant dense<0.000000e+00> : vector<4x8xf32>
    %52 = vector.multi_reduction <add>, %51, %cst_19 [2] : vector<4x8x8xf32> to vector<4x8xf32>
    %53 = vector.shape_cast %52 : vector<4x8xf32> to vector<4x8x1xf32>
    %54 = tpu.reciprocal %53 {approx = true} : vector<4x8x1xf32> -> vector<4x8x1xf32>
    %55 = vector.broadcast %54 : vector<4x8x1xf32> to vector<4x8x8xf32>
    %56 = arith.mulf %51, %55 : vector<4x8x8xf32>
    "tpu.trace_start"() <{level = 10 : i32, message = "bqk,bkd->bqd"}> : () -> ()
    %cst_20 = arith.constant dense<0.000000e+00> : vector<4x8x8xf32>
    %57 = tpu.matmul %56, %41, %cst_20 {dimension_numbers = #tpu.dot_dimension_numbers<[2], [1], [1], [2], [0, 0, 0, 1, 1, 2], [0], [0]>} : vector<4x8x8xf32>, vector<4x8x8xf32>, vector<4x8x8xf32> -> vector<4x8x8xf32>
    "tpu.trace_stop"() : () -> ()
    %58 = vector.shape_cast %57 : vector<4x8x8xf32> to vector<32x8xf32>
    %c0_21 = arith.constant 0 : index
    %c0_22 = arith.constant 0 : index
    %59 = vector.load %arg5[%c0_21, %c0_22] : memref<32x32xf32, #tpu.memory_space<vmem>>, vector<8x32xf32>
    %cst_23 = arith.constant dense<0.000000e+00> : vector<32x32xf32>
    %60 = tpu.matmul %58, %59, %cst_23 {dimension_numbers = #tpu.dot_dimension_numbers<[1], [0], [0], [1], [0, 0, 1, 1], [], []>} : vector<32x8xf32>, vector<8x32xf32>, vector<32x32xf32> -> vector<32x32xf32>
    %61 = arith.addf %35, %60 : vector<32x32xf32>
    %62 = vector.extract_strided_slice %27 {offsets = [0, 8], sizes = [32, 8], strides = [1, 1]} : vector<32x96xf32> to vector<32x8xf32>
    %63 = vector.shape_cast %62 : vector<32x8xf32> to vector<4x8x8xf32>
    %64 = vector.extract_strided_slice %27 {offsets = [0, 40], sizes = [32, 8], strides = [1, 1]} : vector<32x96xf32> to vector<32x8xf32>
    %65 = vector.shape_cast %64 : vector<32x8xf32> to vector<4x8x8xf32>
    %66 = vector.extract_strided_slice %27 {offsets = [0, 72], sizes = [32, 8], strides = [1, 1]} : vector<32x96xf32> to vector<32x8xf32>
    %67 = vector.shape_cast %66 : vector<32x8xf32> to vector<4x8x8xf32>
    "tpu.trace_start"() <{level = 10 : i32, message = "bqd,bkd->bqk"}> : () -> ()
    %cst_24 = arith.constant dense<0.000000e+00> : vector<4x8x8xf32>
    %68 = tpu.matmul %63, %65, %cst_24 {dimension_numbers = #tpu.dot_dimension_numbers<[2], [2], [1], [1], [0, 0, 0, 1, 1, 1], [0], [0]>} : vector<4x8x8xf32>, vector<4x8x8xf32>, vector<4x8x8xf32> -> vector<4x8x8xf32>
    "tpu.trace_stop"() : () -> ()
    %cst_25 = arith.constant 0.353553385 : f32
    %69 = vector.broadcast %cst_25 : f32 to vector<4x8x8xf32>
    %70 = arith.mulf %68, %69 : vector<4x8x8xf32>
    %71 = vector.broadcast %34 : vector<1x8x8xf32> to vector<4x8x8xf32>
    %72 = arith.addf %70, %71 : vector<4x8x8xf32>
    %cst_26 = arith.constant dense<0xFF800000> : vector<4x8xf32>
    %73 = vector.multi_reduction <maximumf>, %72, %cst_26 [2] : vector<4x8x8xf32> to vector<4x8xf32>
    %74 = vector.shape_cast %73 : vector<4x8xf32> to vector<4x8x1xf32>
    %75 = vector.broadcast %74 : vector<4x8x1xf32> to vector<4x8x8xf32>
    %76 = arith.subf %72, %75 : vector<4x8x8xf32>
    %77 = math.exp %76 : vector<4x8x8xf32>
    %cst_27 = arith.constant dense<0.000000e+00> : vector<4x8xf32>
    %78 = vector.multi_reduction <add>, %77, %cst_27 [2] : vector<4x8x8xf32> to vector<4x8xf32>
    %79 = vector.shape_cast %78 : vector<4x8xf32> to vector<4x8x1xf32>
    %80 = tpu.reciprocal %79 {approx = true} : vector<4x8x1xf32> -> vector<4x8x1xf32>
    %81 = vector.broadcast %80 : vector<4x8x1xf32> to vector<4x8x8xf32>
    %82 = arith.mulf %77, %81 : vector<4x8x8xf32>
    "tpu.trace_start"() <{level = 10 : i32, message = "bqk,bkd->bqd"}> : () -> ()
    %cst_28 = arith.constant dense<0.000000e+00> : vector<4x8x8xf32>
    %83 = tpu.matmul %82, %67, %cst_28 {dimension_numbers = #tpu.dot_dimension_numbers<[2], [1], [1], [2], [0, 0, 0, 1, 1, 2], [0], [0]>} : vector<4x8x8xf32>, vector<4x8x8xf32>, vector<4x8x8xf32> -> vector<4x8x8xf32>
    "tpu.trace_stop"() : () -> ()
    %84 = vector.shape_cast %83 : vector<4x8x8xf32> to vector<32x8xf32>
    %c8 = arith.constant 8 : index
    %c0_29 = arith.constant 0 : index
    %85 = vector.load %arg5[%c8, %c0_29] : memref<32x32xf32, #tpu.memory_space<vmem>>, vector<8x32xf32>
    %cst_30 = arith.constant dense<0.000000e+00> : vector<32x32xf32>
    %86 = tpu.matmul %84, %85, %cst_30 {dimension_numbers = #tpu.dot_dimension_numbers<[1], [0], [0], [1], [0, 0, 1, 1], [], []>} : vector<32x8xf32>, vector<8x32xf32>, vector<32x32xf32> -> vector<32x32xf32>
    %87 = arith.addf %61, %86 : vector<32x32xf32>
    %88 = vector.extract_strided_slice %27 {offsets = [0, 16], sizes = [32, 8], strides = [1, 1]} : vector<32x96xf32> to vector<32x8xf32>
    %89 = vector.shape_cast %88 : vector<32x8xf32> to vector<4x8x8xf32>
    %90 = vector.extract_strided_slice %27 {offsets = [0, 48], sizes = [32, 8], strides = [1, 1]} : vector<32x96xf32> to vector<32x8xf32>
    %91 = vector.shape_cast %90 : vector<32x8xf32> to vector<4x8x8xf32>
    %92 = vector.extract_strided_slice %27 {offsets = [0, 80], sizes = [32, 8], strides = [1, 1]} : vector<32x96xf32> to vector<32x8xf32>
    %93 = vector.shape_cast %92 : vector<32x8xf32> to vector<4x8x8xf32>
    "tpu.trace_start"() <{level = 10 : i32, message = "bqd,bkd->bqk"}> : () -> ()
    %cst_31 = arith.constant dense<0.000000e+00> : vector<4x8x8xf32>
    %94 = tpu.matmul %89, %91, %cst_31 {dimension_numbers = #tpu.dot_dimension_numbers<[2], [2], [1], [1], [0, 0, 0, 1, 1, 1], [0], [0]>} : vector<4x8x8xf32>, vector<4x8x8xf32>, vector<4x8x8xf32> -> vector<4x8x8xf32>
    "tpu.trace_stop"() : () -> ()
    %cst_32 = arith.constant 0.353553385 : f32
    %95 = vector.broadcast %cst_32 : f32 to vector<4x8x8xf32>
    %96 = arith.mulf %94, %95 : vector<4x8x8xf32>
    %97 = vector.broadcast %34 : vector<1x8x8xf32> to vector<4x8x8xf32>
    %98 = arith.addf %96, %97 : vector<4x8x8xf32>
    %cst_33 = arith.constant dense<0xFF800000> : vector<4x8xf32>
    %99 = vector.multi_reduction <maximumf>, %98, %cst_33 [2] : vector<4x8x8xf32> to vector<4x8xf32>
    %100 = vector.shape_cast %99 : vector<4x8xf32> to vector<4x8x1xf32>
    %101 = vector.broadcast %100 : vector<4x8x1xf32> to vector<4x8x8xf32>
    %102 = arith.subf %98, %101 : vector<4x8x8xf32>
    %103 = math.exp %102 : vector<4x8x8xf32>
    %cst_34 = arith.constant dense<0.000000e+00> : vector<4x8xf32>
    %104 = vector.multi_reduction <add>, %103, %cst_34 [2] : vector<4x8x8xf32> to vector<4x8xf32>
    %105 = vector.shape_cast %104 : vector<4x8xf32> to vector<4x8x1xf32>
    %106 = tpu.reciprocal %105 {approx = true} : vector<4x8x1xf32> -> vector<4x8x1xf32>
    %107 = vector.broadcast %106 : vector<4x8x1xf32> to vector<4x8x8xf32>
    %108 = arith.mulf %103, %107 : vector<4x8x8xf32>
    "tpu.trace_start"() <{level = 10 : i32, message = "bqk,bkd->bqd"}> : () -> ()
    %cst_35 = arith.constant dense<0.000000e+00> : vector<4x8x8xf32>
    %109 = tpu.matmul %108, %93, %cst_35 {dimension_numbers = #tpu.dot_dimension_numbers<[2], [1], [1], [2], [0, 0, 0, 1, 1, 2], [0], [0]>} : vector<4x8x8xf32>, vector<4x8x8xf32>, vector<4x8x8xf32> -> vector<4x8x8xf32>
    "tpu.trace_stop"() : () -> ()
    %110 = vector.shape_cast %109 : vector<4x8x8xf32> to vector<32x8xf32>
    %c16 = arith.constant 16 : index
    %c0_36 = arith.constant 0 : index
    %111 = vector.load %arg5[%c16, %c0_36] : memref<32x32xf32, #tpu.memory_space<vmem>>, vector<8x32xf32>
    %cst_37 = arith.constant dense<0.000000e+00> : vector<32x32xf32>
    %112 = tpu.matmul %110, %111, %cst_37 {dimension_numbers = #tpu.dot_dimension_numbers<[1], [0], [0], [1], [0, 0, 1, 1], [], []>} : vector<32x8xf32>, vector<8x32xf32>, vector<32x32xf32> -> vector<32x32xf32>
    %113 = arith.addf %87, %112 : vector<32x32xf32>
    %114 = vector.extract_strided_slice %27 {offsets = [0, 24], sizes = [32, 8], strides = [1, 1]} : vector<32x96xf32> to vector<32x8xf32>
    %115 = vector.shape_cast %114 : vector<32x8xf32> to vector<4x8x8xf32>
    %116 = vector.extract_strided_slice %27 {offsets = [0, 56], sizes = [32, 8], strides = [1, 1]} : vector<32x96xf32> to vector<32x8xf32>
    %117 = vector.shape_cast %116 : vector<32x8xf32> to vector<4x8x8xf32>
    %118 = vector.extract_strided_slice %27 {offsets = [0, 88], sizes = [32, 8], strides = [1, 1]} : vector<32x96xf32> to vector<32x8xf32>
    %119 = vector.shape_cast %118 : vector<32x8xf32> to vector<4x8x8xf32>
    "tpu.trace_start"() <{level = 10 : i32, message = "bqd,bkd->bqk"}> : () -> ()
    %cst_38 = arith.constant dense<0.000000e+00> : vector<4x8x8xf32>
    %120 = tpu.matmul %115, %117, %cst_38 {dimension_numbers = #tpu.dot_dimension_numbers<[2], [2], [1], [1], [0, 0, 0, 1, 1, 1], [0], [0]>} : vector<4x8x8xf32>, vector<4x8x8xf32>, vector<4x8x8xf32> -> vector<4x8x8xf32>
    "tpu.trace_stop"() : () -> ()
    %cst_39 = arith.constant 0.353553385 : f32
    %121 = vector.broadcast %cst_39 : f32 to vector<4x8x8xf32>
    %122 = arith.mulf %120, %121 : vector<4x8x8xf32>
    %123 = vector.broadcast %34 : vector<1x8x8xf32> to vector<4x8x8xf32>
    %124 = arith.addf %122, %123 : vector<4x8x8xf32>
    %cst_40 = arith.constant dense<0xFF800000> : vector<4x8xf32>
    %125 = vector.multi_reduction <maximumf>, %124, %cst_40 [2] : vector<4x8x8xf32> to vector<4x8xf32>
    %126 = vector.shape_cast %125 : vector<4x8xf32> to vector<4x8x1xf32>
    %127 = vector.broadcast %126 : vector<4x8x1xf32> to vector<4x8x8xf32>
    %128 = arith.subf %124, %127 : vector<4x8x8xf32>
    %129 = math.exp %128 : vector<4x8x8xf32>
    %cst_41 = arith.constant dense<0.000000e+00> : vector<4x8xf32>
    %130 = vector.multi_reduction <add>, %129, %cst_41 [2] : vector<4x8x8xf32> to vector<4x8xf32>
    %131 = vector.shape_cast %130 : vector<4x8xf32> to vector<4x8x1xf32>
    %132 = tpu.reciprocal %131 {approx = true} : vector<4x8x1xf32> -> vector<4x8x1xf32>
    %133 = vector.broadcast %132 : vector<4x8x1xf32> to vector<4x8x8xf32>
    %134 = arith.mulf %129, %133 : vector<4x8x8xf32>
    "tpu.trace_start"() <{level = 10 : i32, message = "bqk,bkd->bqd"}> : () -> ()
    %cst_42 = arith.constant dense<0.000000e+00> : vector<4x8x8xf32>
    %135 = tpu.matmul %134, %119, %cst_42 {dimension_numbers = #tpu.dot_dimension_numbers<[2], [1], [1], [2], [0, 0, 0, 1, 1, 2], [0], [0]>} : vector<4x8x8xf32>, vector<4x8x8xf32>, vector<4x8x8xf32> -> vector<4x8x8xf32>
    "tpu.trace_stop"() : () -> ()
    %136 = vector.shape_cast %135 : vector<4x8x8xf32> to vector<32x8xf32>
    %c24 = arith.constant 24 : index
    %c0_43 = arith.constant 0 : index
    %137 = vector.load %arg5[%c24, %c0_43] : memref<32x32xf32, #tpu.memory_space<vmem>>, vector<8x32xf32>
    %cst_44 = arith.constant dense<0.000000e+00> : vector<32x32xf32>
    %138 = tpu.matmul %136, %137, %cst_44 {dimension_numbers = #tpu.dot_dimension_numbers<[1], [0], [0], [1], [0, 0, 1, 1], [], []>} : vector<32x8xf32>, vector<8x32xf32>, vector<32x32xf32> -> vector<32x32xf32>
    %139 = arith.addf %113, %138 : vector<32x32xf32>
    %c0_45 = arith.constant 0 : index
    %c0_46 = arith.constant 0 : index
    %140 = vector.load %arg6[%c0_45, %c0_46] : memref<1x32xf32, #tpu.memory_space<vmem>>, vector<1x32xf32>
    %141 = vector.broadcast %140 : vector<1x32xf32> to vector<32x32xf32>
    %142 = arith.addf %139, %141 : vector<32x32xf32>
    %143 = arith.addf %1, %142 : vector<32x32xf32>
    %c0_47 = arith.constant 0 : index
    %c0_48 = arith.constant 0 : index
    %144 = vector.load %arg7[%c0_47, %c0_48] : memref<1x32xf32, #tpu.memory_space<vmem>>, vector<1x32xf32>
    %c0_49 = arith.constant 0 : index
    %c0_50 = arith.constant 0 : index
    %145 = vector.load %arg8[%c0_49, %c0_50] : memref<1x32xf32, #tpu.memory_space<vmem>>, vector<1x32xf32>
    %cst_51 = arith.constant dense<0.000000e+00> : vector<32xf32>
    %146 = vector.multi_reduction <add>, %143, %cst_51 [1] : vector<32x32xf32> to vector<32xf32>
    %147 = vector.shape_cast %146 : vector<32xf32> to vector<32x1xf32>
    %cst_52 = arith.constant 3.200000e+01 : f32
    %148 = vector.broadcast %cst_52 : f32 to vector<32x1xf32>
    %149 = arith.divf %147, %148 : vector<32x1xf32>
    %150 = vector.broadcast %149 : vector<32x1xf32> to vector<32x32xf32>
    %151 = arith.subf %143, %150 : vector<32x32xf32>
    %152 = arith.mulf %151, %151 : vector<32x32xf32>
    %cst_53 = arith.constant dense<0.000000e+00> : vector<32xf32>
    %153 = vector.multi_reduction <add>, %152, %cst_53 [1] : vector<32x32xf32> to vector<32xf32>
    %154 = vector.shape_cast %153 : vector<32xf32> to vector<32x1xf32>
    %cst_54 = arith.constant 3.200000e+01 : f32
    %155 = vector.broadcast %cst_54 : f32 to vector<32x1xf32>
    %156 = arith.divf %154, %155 : vector<32x1xf32>
    %157 = vector.broadcast %149 : vector<32x1xf32> to vector<32x32xf32>
    %158 = arith.subf %143, %157 : vector<32x32xf32>
    %cst_55 = arith.constant 9.99999974E-6 : f32
    %159 = vector.broadcast %cst_55 : f32 to vector<32x1xf32>
    %160 = arith.addf %156, %159 : vector<32x1xf32>
    %161 = math.rsqrt %160 : vector<32x1xf32>
    %162 = vector.broadcast %161 : vector<32x1xf32> to vector<32x32xf32>
    %163 = arith.mulf %158, %162 : vector<32x32xf32>
    %164 = vector.broadcast %144 : vector<1x32xf32> to vector<32x32xf32>
    %165 = arith.mulf %163, %164 : vector<32x32xf32>
    %166 = vector.broadcast %145 : vector<1x32xf32> to vector<32x32xf32>
    %167 = arith.addf %165, %166 : vector<32x32xf32>
    %c0_56 = arith.constant 0 : index
    %c0_57 = arith.constant 0 : index
    %168 = vector.load %arg9[%c0_56, %c0_57] : memref<32x32xf32, #tpu.memory_space<vmem>>, vector<32x32xf32>
    %cst_58 = arith.constant dense<0.000000e+00> : vector<32x32xf32>
    %169 = tpu.matmul %167, %168, %cst_58 {dimension_numbers = #tpu.dot_dimension_numbers<[1], [0], [0], [1], [0, 0, 1, 1], [], []>} : vector<32x32xf32>, vector<32x32xf32>, vector<32x32xf32> -> vector<32x32xf32>
    %c0_59 = arith.constant 0 : index
    %c0_60 = arith.constant 0 : index
    %170 = vector.load %arg10[%c0_59, %c0_60] : memref<1x32xf32, #tpu.memory_space<vmem>>, vector<1x32xf32>
    %171 = vector.broadcast %170 : vector<1x32xf32> to vector<32x32xf32>
    %172 = arith.addf %169, %171 : vector<32x32xf32>
    %cst_61 = arith.constant 0.000000e+00 : f32
    %173 = vector.broadcast %cst_61 : f32 to vector<32x32xf32>
    %174 = arith.maximumf %172, %173 : vector<32x32xf32>
    %c0_62 = arith.constant 0 : index
    %c0_63 = arith.constant 0 : index
    %175 = vector.load %arg11[%c0_62, %c0_63] : memref<32x32xf32, #tpu.memory_space<vmem>>, vector<32x32xf32>
    %cst_64 = arith.constant dense<0.000000e+00> : vector<32x32xf32>
    %176 = tpu.matmul %174, %175, %cst_64 {dimension_numbers = #tpu.dot_dimension_numbers<[1], [0], [0], [1], [0, 0, 1, 1], [], []>} : vector<32x32xf32>, vector<32x32xf32>, vector<32x32xf32> -> vector<32x32xf32>
    %c0_65 = arith.constant 0 : index
    %c0_66 = arith.constant 0 : index
    %177 = vector.load %arg12[%c0_65, %c0_66] : memref<1x32xf32, #tpu.memory_space<vmem>>, vector<1x32xf32>
    %178 = vector.broadcast %177 : vector<1x32xf32> to vector<32x32xf32>
    %179 = arith.addf %176, %178 : vector<32x32xf32>
    %180 = arith.addf %143, %179 : vector<32x32xf32>
    %181 = vector.shape_cast %180 : vector<32x32xf32> to vector<4x8x32xf32>
    %c0_67 = arith.constant 0 : index
    %c0_68 = arith.constant 0 : index
    %c0_69 = arith.constant 0 : index
    %182 = vector.load %arg13[%c0_67, %c0_68, %c0_69] : memref<4x8x32xf32, #tpu.memory_space<vmem>>, vector<4x8x32xf32>
    tpu.vector_store %arg13[%c0_67, %c0_68, %c0_69], %181 {strides = array<i32>} : memref<4x8x32xf32, #tpu.memory_space<vmem>>, vector<4x8x32xf32>,
    %183 = vector.shape_cast %56 : vector<4x8x8xf32> to vector<4x1x8x8xf32>
    %184 = vector.shape_cast %82 : vector<4x8x8xf32> to vector<4x1x8x8xf32>
    %185 = vector.shape_cast %108 : vector<4x8x8xf32> to vector<4x1x8x8xf32>
    %186 = vector.shape_cast %134 : vector<4x8x8xf32> to vector<4x1x8x8xf32>
    %187 = tpu.concatenate %183, %184, %185, %186 in 1 : vector<4x1x8x8xf32>, vector<4x1x8x8xf32>, vector<4x1x8x8xf32>, vector<4x1x8x8xf32> -> vector<4x4x8x8xf32>
    %c0_70 = arith.constant 0 : index
    %c0_71 = arith.constant 0 : index
    %c0_72 = arith.constant 0 : index
    %c0_73 = arith.constant 0 : index
    %188 = vector.load %arg14[%c0_70, %c0_71, %c0_72, %c0_73] : memref<4x4x8x8xf32, #tpu.memory_space<vmem>>, vector<4x4x8x8xf32>
    tpu.vector_store %arg14[%c0_70, %c0_71, %c0_72, %c0_73], %187 {strides = array<i32>} : memref<4x4x8x8xf32, #tpu.memory_space<vmem>>, vector<4x4x8x8xf32>,
    return
  }
  func.func @transform_0(%arg0: i32) -> (i32, i32, i32) {
    %c0_i32 = arith.constant 0 : i32
    %c0_i32_0 = arith.constant 0 : i32
    %c0_i32_1 = arith.constant 0 : i32
    return %arg0, %c0_i32, %c0_i32_0 : i32, i32, i32
  }
  func.func @transform_1(%arg0: i32) -> (i32, i32) {
    %c0_i32 = arith.constant 0 : i32
    %c0_i32_0 = arith.constant 0 : i32
    %c0_i32_1 = arith.constant 0 : i32
    return %c0_i32, %c0_i32_0 : i32, i32
  }
  func.func @transform_2(%arg0: i32) -> (i32, i32) {
    %c0_i32 = arith.constant 0 : i32
    %c0_i32_0 = arith.constant 0 : i32
    %c0_i32_1 = arith.constant 0 : i32
    return %c0_i32, %c0_i32_0 : i32, i32
  }
  func.func @transform_3(%arg0: i32) -> (i32, i32) {
    %c0_i32 = arith.constant 0 : i32
    %c0_i32_0 = arith.constant 0 : i32
    %c0_i32_1 = arith.constant 0 : i32
    return %c0_i32, %c0_i32_0 : i32, i32
  }
  func.func @transform_4(%arg0: i32) -> (i32, i32) {
    %c0_i32 = arith.constant 0 : i32
    %c0_i32_0 = arith.constant 0 : i32
    %c0_i32_1 = arith.constant 0 : i32
    return %c0_i32, %c0_i32_0 : i32, i32
  }
  func.func @transform_5(%arg0: i32) -> (i32, i32) {
    %c0_i32 = arith.constant 0 : i32
    %c0_i32_0 = arith.constant 0 : i32
    %c0_i32_1 = arith.constant 0 : i32
    return %c0_i32, %c0_i32_0 : i32, i32
  }
  func.func @transform_6(%arg0: i32) -> (i32, i32) {
    %c0_i32 = arith.constant 0 : i32
    %c0_i32_0 = arith.constant 0 : i32
    %c0_i32_1 = arith.constant 0 : i32
    return %c0_i32, %c0_i32_0 : i32, i32
  }
  func.func @transform_7(%arg0: i32) -> (i32, i32) {
    %c0_i32 = arith.constant 0 : i32
    %c0_i32_0 = arith.constant 0 : i32
    %c0_i32_1 = arith.constant 0 : i32
    return %c0_i32, %c0_i32_0 : i32, i32
  }
  func.func @transform_8(%arg0: i32) -> (i32, i32) {
    %c0_i32 = arith.constant 0 : i32
    %c0_i32_0 = arith.constant 0 : i32
    %c0_i32_1 = arith.constant 0 : i32
    return %c0_i32, %c0_i32_0 : i32, i32
  }
  func.func @transform_9(%arg0: i32) -> (i32, i32) {
    %c0_i32 = arith.constant 0 : i32
    %c0_i32_0 = arith.constant 0 : i32
    %c0_i32_1 = arith.constant 0 : i32
    return %c0_i32, %c0_i32_0 : i32, i32
  }
  func.func @transform_10(%arg0: i32) -> (i32, i32) {
    %c0_i32 = arith.constant 0 : i32
    %c0_i32_0 = arith.constant 0 : i32
    %c0_i32_1 = arith.constant 0 : i32
    return %c0_i32, %c0_i32_0 : i32, i32
  }
  func.func @transform_11(%arg0: i32) -> (i32, i32) {
    %c0_i32 = arith.constant 0 : i32
    %c0_i32_0 = arith.constant 0 : i32
    %c0_i32_1 = arith.constant 0 : i32
    return %c0_i32, %c0_i32_0 : i32, i32
  }
  func.func @transform_12(%arg0: i32) -> (i32, i32, i32) {
    %c0_i32 = arith.constant 0 : i32
    %c0_i32_0 = arith.constant 0 : i32
    %c0_i32_1 = arith.constant 0 : i32
    return %arg0, %c0_i32, %c0_i32_0 : i32, i32, i32
  }
  func.func @transform_13(%arg0: i32) -> (i32, i32, i32, i32) {
    %c0_i32 = arith.constant 0 : i32
    %c0_i32_0 = arith.constant 0 : i32
    %c0_i32_1 = arith.constant 0 : i32
    %c0_i32_2 = arith.constant 0 : i32
    return %arg0, %c0_i32, %c0_i32_0, %c0_i32_1 : i32, i32, i32, i32
  }
}

</mosaic_0001>

<llo_original>
// kernel: tpu_custom_call.1
$region0: #{tpu_custom_call.1}
  #allocation0 [shape = 'u32[]', space=smem, size = 0x4, offset = 0x4, fixed_abs, tag = 'smem constant byte address 0x4 - core index']
  #allocation1 [shape = 'u32[72,128]{1,0:T(1,128)}', space=vmem, size = 0x9000, scoped, tag = 'internal scratch']
  %s0 = inlined_call_operand.hbm [shape: f32[8,8,32], index: 0, kind: input, shape index: {}]
  %s1 = inlined_call_operand.hbm [shape: f32[1,32], index: 1, kind: input, shape index: {}]
  %s2 = inlined_call_operand.vmem [shape: f32[1,32], index: 2, kind: input, shape index: {}]
  %s3 = inlined_call_operand.hbm [shape: f32[32,96], index: 3, kind: input, shape index: {}]
  %s4 = inlined_call_operand.hbm [shape: f32[32,32], index: 4, kind: input, shape index: {}]
  %s5 = inlined_call_operand.vmem [shape: f32[1,32], index: 5, kind: input, shape index: {}]
  %s6 = inlined_call_operand.vmem [shape: f32[1,32], index: 6, kind: input, shape index: {}]
  %s7 = inlined_call_operand.vmem [shape: f32[1,32], index: 7, kind: input, shape index: {}]
  %s8 = inlined_call_operand.hbm [shape: f32[32,32], index: 8, kind: input, shape index: {}]
  %s9 = inlined_call_operand.vmem [shape: f32[1,32], index: 9, kind: input, shape index: {}]
  %s10 = inlined_call_operand.hbm [shape: f32[32,32], index: 10, kind: input, shape index: {}]
  %s11 = inlined_call_operand.vmem [shape: f32[1,32], index: 11, kind: input, shape index: {}]
  %s12 = inlined_call_operand.hbm [shape: f32[8,8,32], index: 12, kind: output, shape index: {0}]
  %s13 = inlined_call_operand.hbm [shape: f32[8,4,8,8], index: 13, kind: output, shape index: {1}]
  %14 = xla_tuple %s12, %s13
  %s15 = sld [smem:[#allocation0]]
  $region113: #{tpu_custom_call.1} parent=0
    _
  %s17 = ssub.s32 1, %s15
  %s18 = scalar_select 0, %s17, %s15
  $region1: #{tpu_custom_call.1} parent=0
    #allocation2 [shape = 'u8[32768]{0}', space=vmem, size = 0x8000, scoped, tag = 'input window, operand 0']
    #allocation3 [shape = 's32[2]{0}', space=sflag, size = 0x8, scoped, tag = 'scoped memory for tpu_custom_call.1']
    #allocation4 [shape = 's32[2]{0}', space=sflag, size = 0x8, scoped, tag = 'scoped memory for tpu_custom_call.1']
    #allocation5 [shape = 'u8[512]{0}', space=vmem, size = 0x400, scoped, tag = 'input window, operand 1, single buffered']
    #allocation6 [shape = 's32[1]{0}', space=sflag, size = 0x4, scoped, tag = 'scoped memory for tpu_custom_call.1']
    #allocation7 [shape = 'u8[16384]{0}', space=vmem, size = 0x4000, scoped, tag = 'input window, operand 3, single buffered']
    #allocation8 [shape = 'u8[16384]{0}', space=vmem, size = 0x4000, scoped, tag = 'input window, operand 4, single buffered']
    #allocation9 [shape = 's32[1]{0}', space=sflag, size = 0x4, scoped, tag = 'scoped memory for tpu_custom_call.1']
    #allocation10 [shape = 'u8[16384]{0}', space=vmem, size = 0x4000, scoped, tag = 'input window, operand 8, single buffered']
    #allocation11 [shape = 'u8[16384]{0}', space=vmem, size = 0x4000, scoped, tag = 'input window, operand 10, single buffered']
    #allocation12 [shape = 's32[1]{0}', space=sflag, size = 0x4, scoped, tag = 'scoped memory for tpu_custom_call.1']
    #allocation13 [shape = 'u8[32768]{0}', space=vmem, size = 0x8000, scoped, tag = 'output window, operand 0']
    #allocation14 [shape = 'u8[131072]{0}', space=vmem, size = 0x20000, scoped, tag = 'output window, operand 1']
    #allocation15 [shape = 's32[2]{0}', space=sflag, size = 0x8, scoped, tag = 'scoped memory for tpu_custom_call.1']
    %19 = vsyncpa [#allocation3], 0
    %s20 = scalar_lea.sflag [#allocation3], 1
    %21 = vsyncpa %s20, 0
    %22 = vsyncpa [#allocation6], 0
    %23 = vsyncpa [#allocation9], 0
    %24 = vsyncpa [#allocation12], 0
    %25 = vsyncpa [#allocation4], 0
    %s26 = scalar_lea.sflag [#allocation4], 1
    %27 = vsyncpa %s26, 0
    %28 = vsyncpa [#allocation15], 0
    %s29 = scalar_lea.sflag [#allocation15], 1
    %30 = vsyncpa %s29, 0
    loop: start=0, step=1, limit=4
    $region2: #{tpu_custom_call.1} parent=1 // loop_pre_header
      _
    $region3: #{tpu_custom_call.1} parent=1 // loop_header
      %s32 = sphi 0, %s36
      %p33 = scmp.ge.s32.totalorder %s32, 4
      %s42 = sphi 0, %s44
      %s45 = sphi 0, %s42
      %s46 = sphi 0, %s45
      %s62 = sphi 0, %s46
      %s66 = sphi 0, %s66
      %s68 = sphi 0, %s66
      %s69 = sphi 0, %s68
      %s83 = sphi 0, %s69
      %s87 = sphi 0, %s87
      %s89 = sphi 0, %s87
      %s90 = sphi 0, %s89
      %s104 = sphi 0, %s90
      %s108 = sphi 0, %s108
      %s110 = sphi 0, %s108
      %s111 = sphi 0, %s110
      %s125 = sphi 0, %s111
      %s129 = sphi 0, %s129
      %s131 = sphi 0, %s129
      %s132 = sphi 0, %s131
      %s146 = sphi 0, %s132
      %s150 = sphi 0, %s150
      %s152 = sphi 0, %s150
      %s153 = sphi 0, %s152
      %s167 = sphi 0, %s153
      %s171 = sphi 0, %s171
      %s173 = sphi 0, %s171
      %s174 = sphi 0, %s173
      %s188 = sphi 0, %s174
      %s192 = sphi 0, %s192
      %s194 = sphi 0, %s192
      %s195 = sphi 0, %s194
      %s209 = sphi 0, %s195
      %s213 = sphi 0, %s213
      %s215 = sphi 0, %s213
      %s216 = sphi 0, %s215
      %s230 = sphi 0, %s216
      %s234 = sphi 0, %s234
      %s236 = sphi 0, %s234
      %s237 = sphi 0, %s236
      %s251 = sphi 0, %s237
      %s255 = sphi 0, %s255
      %s257 = sphi 0, %s255
      %s258 = sphi 0, %s257
      %s272 = sphi 0, %s258
      %s276 = sphi 0, %s276
      %s278 = sphi 0, %s276
      %s279 = sphi 0, %s278
      %s293 = sphi 0, %s279
      %s299 = sphi 0, %s301
      %s302 = sphi 0, %s299
      %s303 = sphi 0, %s302
      %s319 = sphi 0, %s303
      %s325 = sphi 0, %s327
      %s328 = sphi 0, %s325
      %s329 = sphi 0, %s328
      %s345 = sphi 0, %s329
    $region4: #{tpu_custom_call.1} parent=1 // loop_header_branch
      %35 = sbr.rel (%p33) target = $region8
    $region5: #{tpu_custom_call.1} parent=1 // loop_body
      %s37 = ssub.s32 %s32, 1
      %s38 = ssub.s32 %s32, 2
      %s39 = sadd.s32 %s32, 1
      %s40 = ssub.s32 %s32, %s39
      %p41 = scmp.eq.s32.totalorder %s40, 0
      %s43 = sadd.s32 %s42, 1
      %s44 = scalar_select %p41, %s42, %s43
      %p47 = pneg %p41
      %p48 = scmp.eq.s32.totalorder %s32, 1
      %p49 = por %p47, %p48
      %p50 = scmp.ne.s32.totalorder %s42, %s45
      %p51 = scmp.eq.s32.totalorder %s32, 0
      %p52 = por %p50, %p51
      %p53 = scmp.ne.s32.totalorder %s42, %s45
      %p54 = scmp.eq.s32.totalorder %s37, 1
      %p55 = por %p53, %p54
      %p56 = scmp.ne.s32.totalorder %s45, %s46
      %p57 = scmp.eq.s32.totalorder %s37, 0
      %p58 = por %p56, %p57
      %p59 = scmp.ne.s32.totalorder %s45, %s46
      %p60 = scmp.eq.s32.totalorder %s38, 1
      %p61 = por %p59, %p60
      %p63 = scmp.ne.s32.totalorder %s46, %s62
      %p64 = scmp.eq.s32.totalorder %s38, 0
      %p65 = por %p63, %p64
      %s67 = sadd.s32 %s66, 1
      %p70 = scmp.eq.s32.totalorder %s32, 1
      %p71 = scmp.ne.s32.totalorder %s66, %s68
      %p72 = scmp.eq.s32.totalorder %s32, 0
      %p73 = por %p71, %p72
      %p74 = scmp.ne.s32.totalorder %s66, %s68
      %p75 = scmp.eq.s32.totalorder %s37, 1
      %p76 = por %p74, %p75
      %p77 = scmp.ne.s32.totalorder %s68, %s69
      %p78 = scmp.eq.s32.totalorder %s37, 0
      %p79 = por %p77, %p78
      %p80 = scmp.ne.s32.totalorder %s68, %s69
      %p81 = scmp.eq.s32.totalorder %s38, 1
      %p82 = por %p80, %p81
      %p84 = scmp.ne.s32.totalorder %s69, %s83
      %p85 = scmp.eq.s32.totalorder %s38, 0
      %p86 = por %p84, %p85
      %s88 = sadd.s32 %s87, 1
      %p91 = scmp.eq.s32.totalorder %s32, 1
      %p92 = scmp.ne.s32.totalorder %s87, %s89
      %p93 = scmp.eq.s32.totalorder %s32, 0
      %p94 = por %p92, %p93
      %p95 = scmp.ne.s32.totalorder %s87, %s89
      %p96 = scmp.eq.s32.totalorder %s37, 1
      %p97 = por %p95, %p96
      %p98 = scmp.ne.s32.totalorder %s89, %s90
      %p99 = scmp.eq.s32.totalorder %s37, 0
      %p100 = por %p98, %p99
      %p101 = scmp.ne.s32.totalorder %s89, %s90
      %p102 = scmp.eq.s32.totalorder %s38, 1
      %p103 = por %p101, %p102
      %p105 = scmp.ne.s32.totalorder %s90, %s104
      %p106 = scmp.eq.s32.totalorder %s38, 0
      %p107 = por %p105, %p106
      %s109 = sadd.s32 %s108, 1
      %p112 = scmp.eq.s32.totalorder %s32, 1
      %p113 = scmp.ne.s32.totalorder %s108, %s110
      %p114 = scmp.eq.s32.totalorder %s32, 0
      %p115 = por %p113, %p114
      %p116 = scmp.ne.s32.totalorder %s108, %s110
      %p117 = scmp.eq.s32.totalorder %s37, 1
      %p118 = por %p116, %p117
      %p119 = scmp.ne.s32.totalorder %s110, %s111
      %p120 = scmp.eq.s32.totalorder %s37, 0
      %p121 = por %p119, %p120
      %p122 = scmp.ne.s32.totalorder %s110, %s111
      %p123 = scmp.eq.s32.totalorder %s38, 1
      %p124 = por %p122, %p123
      %p126 = scmp.ne.s32.totalorder %s111, %s125
      %p127 = scmp.eq.s32.totalorder %s38, 0
      %p128 = por %p126, %p127
      %s130 = sadd.s32 %s129, 1
      %p133 = scmp.eq.s32.totalorder %s32, 1
      %p134 = scmp.ne.s32.totalorder %s129, %s131
      %p135 = scmp.eq.s32.totalorder %s32, 0
      %p136 = por %p134, %p135
      %p137 = scmp.ne.s32.totalorder %s129, %s131
      %p138 = scmp.eq.s32.totalorder %s37, 1
      %p139 = por %p137, %p138
      %p140 = scmp.ne.s32.totalorder %s131, %s132
      %p141 = scmp.eq.s32.totalorder %s37, 0
      %p142 = por %p140, %p141
      %p143 = scmp.ne.s32.totalorder %s131, %s132
      %p144 = scmp.eq.s32.totalorder %s38, 1
      %p145 = por %p143, %p144
      %p147 = scmp.ne.s32.totalorder %s132, %s146
      %p148 = scmp.eq.s32.totalorder %s38, 0
      %p149 = por %p147, %p148
      %s151 = sadd.s32 %s150, 1
      %p154 = scmp.eq.s32.totalorder %s32, 1
      %p155 = scmp.ne.s32.totalorder %s150, %s152
      %p156 = scmp.eq.s32.totalorder %s32, 0
      %p157 = por %p155, %p156
      %p158 = scmp.ne.s32.totalorder %s150, %s152
      %p159 = scmp.eq.s32.totalorder %s37, 1
      %p160 = por %p158, %p159
      %p161 = scmp.ne.s32.totalorder %s152, %s153
      %p162 = scmp.eq.s32.totalorder %s37, 0
      %p163 = por %p161, %p162
      %p164 = scmp.ne.s32.totalorder %s152, %s153
      %p165 = scmp.eq.s32.totalorder %s38, 1
      %p166 = por %p164, %p165
      %p168 = scmp.ne.s32.totalorder %s153, %s167
      %p169 = scmp.eq.s32.totalorder %s38, 0
      %p170 = por %p168, %p169
      %s172 = sadd.s32 %s171, 1
      %p175 = scmp.eq.s32.totalorder %s32, 1
      %p176 = scmp.ne.s32.totalorder %s171, %s173
      %p177 = scmp.eq.s32.totalorder %s32, 0
      %p178 = por %p176, %p177
      %p179 = scmp.ne.s32.totalorder %s171, %s173
      %p180 = scmp.eq.s32.totalorder %s37, 1
      %p181 = por %p179, %p180
      %p182 = scmp.ne.s32.totalorder %s173, %s174
      %p183 = scmp.eq.s32.totalorder %s37, 0
      %p184 = por %p182, %p183
      %p185 = scmp.ne.s32.totalorder %s173, %s174
      %p186 = scmp.eq.s32.totalorder %s38, 1
      %p187 = por %p185, %p186
      %p189 = scmp.ne.s32.totalorder %s174, %s188
      %p190 = scmp.eq.s32.totalorder %s38, 0
      %p191 = por %p189, %p190
      %s193 = sadd.s32 %s192, 1
      %p196 = scmp.eq.s32.totalorder %s32, 1
      %p197 = scmp.ne.s32.totalorder %s192, %s194
      %p198 = scmp.eq.s32.totalorder %s32, 0
      %p199 = por %p197, %p198
      %p200 = scmp.ne.s32.totalorder %s192, %s194
      %p201 = scmp.eq.s32.totalorder %s37, 1
      %p202 = por %p200, %p201
      %p203 = scmp.ne.s32.totalorder %s194, %s195
      %p204 = scmp.eq.s32.totalorder %s37, 0
      %p205 = por %p203, %p204
      %p206 = scmp.ne.s32.totalorder %s194, %s195
      %p207 = scmp.eq.s32.totalorder %s38, 1
      %p208 = por %p206, %p207
      %p210 = scmp.ne.s32.totalorder %s195, %s209
      %p211 = scmp.eq.s32.totalorder %s38, 0
      %p212 = por %p210, %p211
      %s214 = sadd.s32 %s213, 1
      %p217 = scmp.eq.s32.totalorder %s32, 1
      %p218 = scmp.ne.s32.totalorder %s213, %s215
      %p219 = scmp.eq.s32.totalorder %s32, 0
      %p220 = por %p218, %p219
      %p221 = scmp.ne.s32.totalorder %s213, %s215
      %p222 = scmp.eq.s32.totalorder %s37, 1
      %p223 = por %p221, %p222
      %p224 = scmp.ne.s32.totalorder %s215, %s216
      %p225 = scmp.eq.s32.totalorder %s37, 0
      %p226 = por %p224, %p225
      %p227 = scmp.ne.s32.totalorder %s215, %s216
      %p228 = scmp.eq.s32.totalorder %s38, 1
      %p229 = por %p227, %p228
      %p231 = scmp.ne.s32.totalorder %s216, %s230
      %p232 = scmp.eq.s32.totalorder %s38, 0
      %p233 = por %p231, %p232
      %s235 = sadd.s32 %s234, 1
      %p238 = scmp.eq.s32.totalorder %s32, 1
      %p239 = scmp.ne.s32.totalorder %s234, %s236
      %p240 = scmp.eq.s32.totalorder %s32, 0
      %p241 = por %p239, %p240
      %p242 = scmp.ne.s32.totalorder %s234, %s236
      %p243 = scmp.eq.s32.totalorder %s37, 1
      %p244 = por %p242, %p243
      %p245 = scmp.ne.s32.totalorder %s236, %s237
      %p246 = scmp.eq.s32.totalorder %s37, 0
      %p247 = por %p245, %p246
      %p248 = scmp.ne.s32.totalorder %s236, %s237
      %p249 = scmp.eq.s32.totalorder %s38, 1
      %p250 = por %p248, %p249
      %p252 = scmp.ne.s32.totalorder %s237, %s251
      %p253 = scmp.eq.s32.totalorder %s38, 0
      %p254 = por %p252, %p253
      %s256 = sadd.s32 %s255, 1
      %p259 = scmp.eq.s32.totalorder %s32, 1
      %p260 = scmp.ne.s32.totalorder %s255, %s257
      %p261 = scmp.eq.s32.totalorder %s32, 0
      %p262 = por %p260, %p261
      %p263 = scmp.ne.s32.totalorder %s255, %s257
      %p264 = scmp.eq.s32.totalorder %s37, 1
      %p265 = por %p263, %p264
      %p266 = scmp.ne.s32.totalorder %s257, %s258
      %p267 = scmp.eq.s32.totalorder %s37, 0
      %p268 = por %p266, %p267
      %p269 = scmp.ne.s32.totalorder %s257, %s258
      %p270 = scmp.eq.s32.totalorder %s38, 1
      %p271 = por %p269, %p270
      %p273 = scmp.ne.s32.totalorder %s258, %s272
      %p274 = scmp.eq.s32.totalorder %s38, 0
      %p275 = por %p273, %p274
      %s277 = sadd.s32 %s276, 1
      %p280 = scmp.eq.s32.totalorder %s32, 1
      %p281 = scmp.ne.s32.totalorder %s276, %s278
      %p282 = scmp.eq.s32.totalorder %s32, 0
      %p283 = por %p281, %p282
      %p284 = scmp.ne.s32.totalorder %s276, %s278
      %p285 = scmp.eq.s32.totalorder %s37, 1
      %p286 = por %p284, %p285
      %p287 = scmp.ne.s32.totalorder %s278, %s279
      %p288 = scmp.eq.s32.totalorder %s37, 0
      %p289 = por %p287, %p288
      %p290 = scmp.ne.s32.totalorder %s278, %s279
      %p291 = scmp.eq.s32.totalorder %s38, 1
      %p292 = por %p290, %p291
      %p294 = scmp.ne.s32.totalorder %s279, %s293
      %p295 = scmp.eq.s32.totalorder %s38, 0
      %p296 = por %p294, %p295
      %s297 = ssub.s32 %s32, %s39
      %p298 = scmp.eq.s32.totalorder %s297, 0
      %s300 = sadd.s32 %s299, 1
      %s301 = scalar_select %p298, %s299, %s300
      %p304 = pneg %p298
      %p305 = scmp.eq.s32.totalorder %s32, 1
      %p306 = por %p304, %p305
      %p307 = scmp.ne.s32.totalorder %s299, %s302
      %p308 = scmp.eq.s32.totalorder %s32, 0
      %p309 = por %p307, %p308
      %p310 = scmp.ne.s32.totalorder %s299, %s302
      %p311 = scmp.eq.s32.totalorder %s37, 1
      %p312 = por %p310, %p311
      %p313 = scmp.ne.s32.totalorder %s302, %s303
      %p314 = scmp.eq.s32.totalorder %s37, 0
      %p315 = por %p313, %p314
      %p316 = scmp.ne.s32.totalorder %s302, %s303
      %p317 = scmp.eq.s32.totalorder %s38, 1
      %p318 = por %p316, %p317
      %p320 = scmp.ne.s32.totalorder %s303, %s319
      %p321 = scmp.eq.s32.totalorder %s38, 0
      %p322 = por %p320, %p321
      %s323 = ssub.s32 %s32, %s39
      %p324 = scmp.eq.s32.totalorder %s323, 0
      %s326 = sadd.s32 %s325, 1
      %s327 = scalar_select %p324, %s325, %s326
      %p330 = pneg %p324
      %p331 = scmp.eq.s32.totalorder %s32, 1
      %p332 = por %p330, %p331
      %p333 = scmp.ne.s32.totalorder %s325, %s328
      %p334 = scmp.eq.s32.totalorder %s32, 0
      %p335 = por %p333, %p334
      %p336 = scmp.ne.s32.totalorder %s325, %s328
      %p337 = scmp.eq.s32.totalorder %s37, 1
      %p338 = por %p336, %p337
      %p339 = scmp.ne.s32.totalorder %s328, %s329
      %p340 = scmp.eq.s32.totalorder %s37, 0
      %p341 = por %p339, %p340
      %p342 = scmp.ne.s32.totalorder %s328, %s329
      %p343 = scmp.eq.s32.totalorder %s38, 1
      %p344 = por %p342, %p343
      %p346 = scmp.ne.s32.totalorder %s329, %s345
      %p347 = scmp.eq.s32.totalorder %s38, 0
      %p348 = por %p346, %p347
      %p349 = scmp.le.s32.totalorder 1, %s32
      %p350 = scmp.lt.s32.totalorder %s32, 3
      %p351 = pnand %p349, %p350
      %p352 = pneg %p351
      // Predicated region
      $region9: #{tpu_custom_call.1} parent=5 // pred_check
        _
      $region10: #{tpu_custom_call.1} parent=5 // pred_check_branch
        %354 = sbr.rel (%p351) target = $region12
      $region11: #{tpu_custom_call.1} parent=5 // pred_region
        %s355 = ssub.s32 %s32, 1
        // Predicated region
        $region13: #{tpu_custom_call.1} parent=11 // pred_check
          %p356 = pneg %p79
        $region14: #{tpu_custom_call.1} parent=11 // pred_check_branch
          %358 = sbr.rel (%p356) target = $region16
        $region15: #{tpu_custom_call.1} parent=11 // pred_region
          %360 = vsyncadd [#allocation6], 0
          %s362 = sshll.u32 %s1, 4
          %s363 = int_to_ptr.hbm [resolvable:$true] %s362
          %s364 = sshll.u32 [#allocation5], 4
          %s365 = int_to_ptr.vmem [resolvable:$true] %s364
          %367 = dma.hbm_to_vmem [thread:$0]  %s363, 16, %s365, [#allocation6]
        $region16: #{tpu_custom_call.1} parent=11 // pred_fallthru
          _
        // Predicated region
        $region17: #{tpu_custom_call.1} parent=11 // pred_check
          %p368 = pneg %p100
        $region18: #{tpu_custom_call.1} parent=11 // pred_check_branch
          %370 = sbr.rel (%p368) target = $region20
        $region19: #{tpu_custom_call.1} parent=11 // pred_region
          _
        $region20: #{tpu_custom_call.1} parent=11 // pred_fallthru
          _
        // Predicated region
        $region21: #{tpu_custom_call.1} parent=11 // pred_check
          %p371 = pneg %p121
        $region22: #{tpu_custom_call.1} parent=11 // pred_check_branch
          %373 = sbr.rel (%p371) target = $region24
        $region23: #{tpu_custom_call.1} parent=11 // pred_region
          %375 = vsyncadd [#allocation6], 0
          %s376 = sshll.u32 %s3, 4
          %s377 = int_to_ptr.hbm [resolvable:$true] %s376
          %s378 = sshll.u32 [#allocation7], 4
          %s379 = int_to_ptr.vmem [resolvable:$true] %s378
          %384 = dma.hbm_to_vmem [thread:$0]  %s377, 512, %s379, [#allocation6], 128, 128, 8
        $region24: #{tpu_custom_call.1} parent=11 // pred_fallthru
          _
        // Predicated region
        $region25: #{tpu_custom_call.1} parent=11 // pred_check
          %p385 = pneg %p142
        $region26: #{tpu_custom_call.1} parent=11 // pred_check_branch
          %387 = sbr.rel (%p385) target = $region28
        $region27: #{tpu_custom_call.1} parent=11 // pred_region
          %389 = vsyncadd [#allocation9], 0
          %s390 = sshll.u32 %s4, 4
          %s391 = int_to_ptr.hbm [resolvable:$true] %s390
          %s392 = sshll.u32 [#allocation8], 4
          %s393 = int_to_ptr.vmem [resolvable:$true] %s392
          %398 = dma.hbm_to_vmem [thread:$0]  %s391, 512, %s393, [#allocation9], 128, 128, 8
        $region28: #{tpu_custom_call.1} parent=11 // pred_fallthru
          _
        // Predicated region
        $region29: #{tpu_custom_call.1} parent=11 // pred_check
          %p399 = pneg %p163
        $region30: #{tpu_custom_call.1} parent=11 // pred_check_branch
          %401 = sbr.rel (%p399) target = $region32
        $region31: #{tpu_custom_call.1} parent=11 // pred_region
          _
        $region32: #{tpu_custom_call.1} parent=11 // pred_fallthru
          _
        // Predicated region
        $region33: #{tpu_custom_call.1} parent=11 // pred_check
          %p402 = pneg %p184
        $region34: #{tpu_custom_call.1} parent=11 // pred_check_branch
          %404 = sbr.rel (%p402) target = $region36
        $region35: #{tpu_custom_call.1} parent=11 // pred_region
          _
        $region36: #{tpu_custom_call.1} parent=11 // pred_fallthru
          _
        // Predicated region
        $region37: #{tpu_custom_call.1} parent=11 // pred_check
          %p405 = pneg %p205
        $region38: #{tpu_custom_call.1} parent=11 // pred_check_branch
          %407 = sbr.rel (%p405) target = $region40
        $region39: #{tpu_custom_call.1} parent=11 // pred_region
          _
        $region40: #{tpu_custom_call.1} parent=11 // pred_fallthru
          _
        // Predicated region
        $region41: #{tpu_custom_call.1} parent=11 // pred_check
          %p408 = pneg %p226
        $region42: #{tpu_custom_call.1} parent=11 // pred_check_branch
          %410 = sbr.rel (%p408) target = $region44
        $region43: #{tpu_custom_call.1} parent=11 // pred_region
          %412 = vsyncadd [#allocation9], 0
          %s413 = sshll.u32 %s8, 4
          %s414 = int_to_ptr.hbm [resolvable:$true] %s413
          %s415 = sshll.u32 [#allocation10], 4
          %s416 = int_to_ptr.vmem [resolvable:$true] %s415
          %421 = dma.hbm_to_vmem [thread:$0]  %s414, 512, %s416, [#allocation9], 128, 128, 8
        $region44: #{tpu_custom_call.1} parent=11 // pred_fallthru
          _
        // Predicated region
        $region45: #{tpu_custom_call.1} parent=11 // pred_check
          %p422 = pneg %p247
        $region46: #{tpu_custom_call.1} parent=11 // pred_check_branch
          %424 = sbr.rel (%p422) target = $region48
        $region47: #{tpu_custom_call.1} parent=11 // pred_region
          _
        $region48: #{tpu_custom_call.1} parent=11 // pred_fallthru
          _
        // Predicated region
        $region49: #{tpu_custom_call.1} parent=11 // pred_check
          %p425 = pneg %p268
        $region50: #{tpu_custom_call.1} parent=11 // pred_check_branch
          %427 = sbr.rel (%p425) target = $region52
        $region51: #{tpu_custom_call.1} parent=11 // pred_region
          %429 = vsyncadd [#allocation12], 0
          %s430 = sshll.u32 %s10, 4
          %s431 = int_to_ptr.hbm [resolvable:$true] %s430
          %s432 = sshll.u32 [#allocation11], 4
          %s433 = int_to_ptr.vmem [resolvable:$true] %s432
          %438 = dma.hbm_to_vmem [thread:$0]  %s431, 512, %s433, [#allocation12], 128, 128, 8
        $region52: #{tpu_custom_call.1} parent=11 // pred_fallthru
          _
        // Predicated region
        $region53: #{tpu_custom_call.1} parent=11 // pred_check
          %p439 = pneg %p289
        $region54: #{tpu_custom_call.1} parent=11 // pred_check_branch
          %441 = sbr.rel (%p439) target = $region56
        $region55: #{tpu_custom_call.1} parent=11 // pred_region
          _
        $region56: #{tpu_custom_call.1} parent=11 // pred_fallthru
          _
      $region12: #{tpu_custom_call.1} parent=5 // pred_fallthru
        _
      %p442 = scmp.lt.s32.totalorder %s32, 2
      // Predicated region
      $region57: #{tpu_custom_call.1} parent=5 // pred_check
        %p443 = pneg %p442
      $region58: #{tpu_custom_call.1} parent=5 // pred_check_branch
        %445 = sbr.rel (%p443) target = $region60
      $region59: #{tpu_custom_call.1} parent=5 // pred_region
        // Predicated region
        $region61: #{tpu_custom_call.1} parent=59 // pred_check
          %p446 = pneg %p52
        $region62: #{tpu_custom_call.1} parent=59 // pred_check_branch
          %448 = sbr.rel (%p446) target = $region64
        $region63: #{tpu_custom_call.1} parent=59 // pred_region
          %s449 = sand.u32 %s42, 1
          %s450 = scalar_lea.sflag [#allocation3], %s449
          %s451 = sand.u32 %s42, 1
          %s452 = smul.addr %s451, 32
          %s453 = scalar_lea.vmem [#allocation2], %s452
          %s454 = smul.u32 4, %s32
          %456 = vsyncadd %s450, 0
          %s457 = smul.addr %s454, 8
          %s458 = scalar_lea.hbm %s0, %s457
          %s459 = sshll.u32 %s458, 4
          %s460 = int_to_ptr.hbm [resolvable:$true] %s459
          %s461 = sshll.u32 %s453, 4
          %s462 = int_to_ptr.vmem [resolvable:$true] %s461
          %467 = dma.hbm_to_vmem [thread:$0]  %s460, 512, %s462, %s450, 128, 128, 8
        $region64: #{tpu_custom_call.1} parent=59 // pred_fallthru
          _
      $region60: #{tpu_custom_call.1} parent=5 // pred_fallthru
        _
      %p468 = scmp.le.s32.totalorder 1, %s32
      %p469 = scmp.lt.s32.totalorder %s32, 3
      %p470 = pnand %p468, %p469
      %p471 = pneg %p470
      // Predicated region
      $region65: #{tpu_custom_call.1} parent=5 // pred_check
        _
      $region66: #{tpu_custom_call.1} parent=5 // pred_check_branch
        %473 = sbr.rel (%p470) target = $region68
      $region67: #{tpu_custom_call.1} parent=5 // pred_region
        %s474 = ssub.s32 %s32, 1
        %s475 = sand.u32 %s45, 1
        %s476 = scalar_lea.sflag [#allocation3], %s475
        %s477 = sand.u32 %s45, 1
        %s478 = smul.addr %s477, 32
        %s479 = scalar_lea.vmem [#allocation2], %s478
        // Predicated region
        $region69: #{tpu_custom_call.1} parent=67 // pred_check
          %p480 = pneg %p58
        $region70: #{tpu_custom_call.1} parent=67 // pred_check_branch
          %482 = sbr.rel (%p480) target = $region72
        $region71: #{tpu_custom_call.1} parent=67 // pred_region
          %484 = dma.done %s476, 512
        $region72: #{tpu_custom_call.1} parent=67 // pred_fallthru
          _
        // Predicated region
        $region73: #{tpu_custom_call.1} parent=67 // pred_check
          %p485 = pneg %p79
        $region74: #{tpu_custom_call.1} parent=67 // pred_check_branch
          %487 = sbr.rel (%p485) target = $region76
        $region75: #{tpu_custom_call.1} parent=67 // pred_region
          %489 = dma.done [#allocation6], 16
        $region76: #{tpu_custom_call.1} parent=67 // pred_fallthru
          _
        // Predicated region
        $region77: #{tpu_custom_call.1} parent=67 // pred_check
          %p490 = pneg %p121
        $region78: #{tpu_custom_call.1} parent=67 // pred_check_branch
          %492 = sbr.rel (%p490) target = $region80
        $region79: #{tpu_custom_call.1} parent=67 // pred_region
          %494 = dma.done [#allocation6], 512
        $region80: #{tpu_custom_call.1} parent=67 // pred_fallthru
          _
        // Predicated region
        $region81: #{tpu_custom_call.1} parent=67 // pred_check
          %p495 = pneg %p142
        $region82: #{tpu_custom_call.1} parent=67 // pred_check_branch
          %497 = sbr.rel (%p495) target = $region84
        $region83: #{tpu_custom_call.1} parent=67 // pred_region
          %499 = dma.done [#allocation9], 512
        $region84: #{tpu_custom_call.1} parent=67 // pred_fallthru
          _
        // Predicated region
        $region85: #{tpu_custom_call.1} parent=67 // pred_check
          %p500 = pneg %p226
        $region86: #{tpu_custom_call.1} parent=67 // pred_check_branch
          %502 = sbr.rel (%p500) target = $region88
        $region87: #{tpu_custom_call.1} parent=67 // pred_region
          %504 = dma.done [#allocation9], 512
        $region88: #{tpu_custom_call.1} parent=67 // pred_fallthru
          _
        // Predicated region
        $region89: #{tpu_custom_call.1} parent=67 // pred_check
          %p505 = pneg %p268
        $region90: #{tpu_custom_call.1} parent=67 // pred_check_branch
          %507 = sbr.rel (%p505) target = $region92
        $region91: #{tpu_custom_call.1} parent=67 // pred_region
          %509 = dma.done [#allocation12], 512
        $region92: #{tpu_custom_call.1} parent=67 // pred_fallthru
          _
        %s510 = sand.u32 %s45, 1
        %s511 = scalar_lea.sflag [#allocation3], %s510
        %s512 = sand.u32 %s45, 1
        %s513 = smul.addr %s512, 32
        %s514 = scalar_lea.vmem [#allocation2], %s513
        %p515 = pneg %p58
        %p516 = pneg %p55
        %p517 = pneg %p79
        %p518 = pneg %p76
        %p519 = pneg %p100
        %p520 = pneg %p97
        %p521 = pneg %p121
        %p522 = pneg %p118
        %p523 = pneg %p142
        %p524 = pneg %p139
        %p525 = pneg %p163
        %p526 = pneg %p160
        %p527 = pneg %p184
        %p528 = pneg %p181
        %p529 = pneg %p205
        %p530 = pneg %p202
        %p531 = pneg %p226
        %p532 = pneg %p223
        %p533 = pneg %p247
        %p534 = pneg %p244
        %p535 = pneg %p268
        %p536 = pneg %p265
        %p537 = pneg %p289
        %p538 = pneg %p286
        %p539 = pneg %p315
        %p540 = pneg %p312
        %s541 = sand.u32 %s302, 1
        %s542 = scalar_lea.sflag [#allocation4], %s541
        %s543 = sand.u32 %s302, 1
        %s544 = smul.addr %s543, 32
        %s545 = scalar_lea.vmem [#allocation13], %s544
        %p546 = pneg %p341
        %p547 = pneg %p338
        %s548 = sand.u32 %s328, 1
        %s549 = scalar_lea.sflag [#allocation15], %s548
        %s550 = sand.u32 %s328, 1
        %s551 = smul.addr %s550, 128
        %s552 = scalar_lea.vmem [#allocation14], %s551
        %s553 = smul.u32 4, %s37
        %s554 = smul.u32 4, %s37
        %s555 = smul.u32 4, %s37
        %v556 = vld [vmem:[%s479] sm:$0xff]
        %v557 = vld [vmem:[%s479 + $0x8] sm:$0xff]
        %v558 = vld [vmem:[%s479 + $0x10] sm:$0xff]
        %v559 = vld [vmem:[%s479 + $0x18] sm:$0xff]
        %v560 = vld [vmem:[#allocation5] sm:$0x1]
        %v561 = vld [vmem:[%s2] sm:$0x1]
        %vm562 = vcmask 261120
        %v563 = vsel %vm562, %v556, 0.0
        %564 = vadd.xlane.f32.xlu0 %v563
        %v565 = vpop.xlane.xlu0 %564
        %v566 = vsel %vm562, %v557, 0.0
        %567 = vadd.xlane.f32.xlu0 %v566
        %v568 = vpop.xlane.xlu0 %567
        %v569 = vsel %vm562, %v558, 0.0
        %570 = vadd.xlane.f32.xlu0 %v569
        %v571 = vpop.xlane.xlu0 %570
        %v572 = vsel %vm562, %v559, 0.0
        %573 = vadd.xlane.f32.xlu0 %v572
        %v574 = vpop.xlane.xlu0 %573
        %v575 = vrcp.pop 32.0
        %v576 = vmul.f32 32.0, %v575
        %v577 = vsub.f32 1.0, %v576
        %v578 = vmul.f32 %v575, %v577
        %v579 = vadd.f32 %v575, %v578
        %vm580 = vweird.f32 %v575
        %v581 = vsel %vm580, %v575, %v579
        %v582 = vmul.f32 %v565, %v581
        %v583 = vmul.f32 %v568, %v581
        %v584 = vmul.f32 %v571, %v581
        %v585 = vmul.f32 %v574, %v581
        %v586 = vsub.f32 %v556, %v582
        %v587 = vsub.f32 %v557, %v583
        %v588 = vsub.f32 %v558, %v584
        %v589 = vsub.f32 %v559, %v585
        %v590 = vmul.f32 %v586, %v586
        %v591 = vmul.f32 %v587, %v587
        %v592 = vmul.f32 %v588, %v588
        %v593 = vmul.f32 %v589, %v589
        %v594 = vsel %vm562, %v590, 0.0
        %595 = vadd.xlane.f32.xlu0 %v594
        %v596 = vpop.xlane.xlu0 %595
        %v597 = vsel %vm562, %v591, 0.0
        %598 = vadd.xlane.f32.xlu0 %v597
        %v599 = vpop.xlane.xlu0 %598
        %v600 = vsel %vm562, %v592, 0.0
        %601 = vadd.xlane.f32.xlu0 %v600
        %v602 = vpop.xlane.xlu0 %601
        %v603 = vsel %vm562, %v593, 0.0
        %604 = vadd.xlane.f32.xlu0 %v603
        %v605 = vpop.xlane.xlu0 %604
        %v606 = vmul.f32 %v596, %v581
        %v607 = vmul.f32 %v599, %v581
        %v608 = vmul.f32 %v602, %v581
        %v609 = vmul.f32 %v605, %v581
        %v610 = vadd.f32 %v606, 1e-05
        %v611 = vadd.f32 %v607, 1e-05
        %v612 = vadd.f32 %v608, 1e-05
        %v613 = vadd.f32 %v609, 1e-05
        %v614 = vrsqrt.pop %v610
        %v615 = vmul.f32 %v614, %v610
        %v616 = vmul.f32 %v615, %v614
        %v617 = vmul.f32 0.5, %v616
        %v618 = vsub.f32 1.5, %v617
        %v619 = vmul.f32 %v614, %v618
        %vm620 = vweird.f32 %v610
        %vm621 = vweird.f32 %v614
        %vm622 = vmor %vm620, %vm621
        %v623 = vsel %vm622, %v614, %v619
        %v624 = vrsqrt.pop %v611
        %v625 = vmul.f32 %v624, %v611
        %v626 = vmul.f32 %v625, %v624
        %v627 = vmul.f32 0.5, %v626
        %v628 = vsub.f32 1.5, %v627
        %v629 = vmul.f32 %v624, %v628
        %vm630 = vweird.f32 %v611
        %vm631 = vweird.f32 %v624
        %vm632 = vmor %vm630, %vm631
        %v633 = vsel %vm632, %v624, %v629
        %v634 = vrsqrt.pop %v612
        %v635 = vmul.f32 %v634, %v612
        %v636 = vmul.f32 %v635, %v634
        %v637 = vmul.f32 0.5, %v636
        %v638 = vsub.f32 1.5, %v637
        %v639 = vmul.f32 %v634, %v638
        %vm640 = vweird.f32 %v612
        %vm641 = vweird.f32 %v634
        %vm642 = vmor %vm640, %vm641
        %v643 = vsel %vm642, %v634, %v639
        %v644 = vrsqrt.pop %v613
        %v645 = vmul.f32 %v644, %v613
        %v646 = vmul.f32 %v645, %v644
        %v647 = vmul.f32 0.5, %v646
        %v648 = vsub.f32 1.5, %v647
        %v649 = vmul.f32 %v644, %v648
        %vm650 = vweird.f32 %v613
        %vm651 = vweird.f32 %v644
        %vm652 = vmor %vm650, %vm651
        %v653 = vsel %vm652, %v644, %v649
        %v654 = vmul.f32 %v586, %v623
        %v655 = vmul.f32 %v587, %v633
        %v656 = vmul.f32 %v588, %v643
        %v657 = vmul.f32 %v589, %v653
        %v659 = vperm.slane %v560, 0
        %v661 = vmul.f32 %v654, %v659
        %v662 = vmul.f32 %v655, %v659
        %v663 = vmul.f32 %v656, %v659
        %v664 = vmul.f32 %v657, %v659
        %v666 = vperm.slane %v561, 0
        %v668 = vadd.f32 %v661, %v666
        %v669 = vadd.f32 %v662, %v666
        %v670 = vadd.f32 %v663, %v666
        %v671 = vadd.f32 %v664, %v666
        %v672 = vld [vmem:[#allocation7] sm:$0xff]
        %v673 = vld [vmem:[#allocation7 + $0x8] sm:$0xff]
        %v674 = vld [vmem:[#allocation7 + $0x10] sm:$0xff]
        %v675 = vld [vmem:[#allocation7 + $0x18] sm:$0xff]
        %v677 = vsel %vm562, %v668, 0
        %v680 = vsel %vm562, %v669, 0
        %v683 = vsel %vm562, %v670, 0
        %v686 = vsel %vm562, %v671, 0
        %688 = vmatpush.msra.mxu0 0.0
        %689 = vmatpush.msra.mxu0 0.0
        %690 = vmatpush.msra.mxu0 0.0
        %691 = vmatpush.msra.mxu0 0.0
        %692 = vmatpush.msra.mxu0 0.0
        %693 = vmatpush.msra.mxu0 0.0
        %694 = vmatpush.msra.mxu0 0.0
        %695 = vmatpush.msra.mxu0 0.0
        %696 = vmatpush.msra.mxu0 0.0
        %697 = vmatpush.msra.mxu0 0.0
        %698 = vmatpush.msra.mxu0 0.0
        %699 = vmatpush.msra.mxu0 0.0
        %700 = vmatpush.msra.mxu0 %v675
        %701 = vmatpush.msra.mxu0 %v674
        %702 = vmatpush.msra.mxu0 %v673
        %703 = vmatpush.msra.mxu0 %v672
        %704 = vmatmul.f32.gmra.mxu0 %v677
        %v705 = vpop.f32.mrf.mxu0
        %v706 = vadd.f32 0.0, %v705
        %707 = vmatmul.f32.gmra.mxu0 %v680
        %v708 = vpop.f32.mrf.mxu0
        %v709 = vadd.f32 0.0, %v708
        %710 = vmatmul.f32.gmra.mxu0 %v683
        %v711 = vpop.f32.mrf.mxu0
        %v712 = vadd.f32 0.0, %v711
        %713 = vmatmul.f32.gmra.mxu0 %v686
        %v714 = vpop.f32.mrf.mxu0
        %v715 = vadd.f32 0.0, %v714
        %716 = vdwg.mxu0
        %v717 = vlaneseq
        %v718 = vshrl.u32 %v717, 7
        %v719 = vlaneseq
        %v720 = vand.u32 %v719, 127
        %vm721 = vcmp.le.s32.totalorder %v720, %v718
        %v722 = vsel %vm721, 0.0, -1e+30
        %724 = vrot.lane.b32.xlu0 %v706, 96
        %v725 = vpop.permute.xlu0 %724
        %vm726 = vcmask 64512
        %v727 = vsel %vm726, %v706, 0
        %v729 = vsel %vm726, %v725, 0
        %731 = vmatpush.xpose.msra.mxu0 0.0
        %732 = vmatpush.xpose.msra.mxu0 0.0
        %733 = vmatpush.xpose.msra.mxu0 0.0
        %734 = vmatpush.xpose.msra.mxu0 0.0
        %735 = vmatpush.xpose.msra.mxu0 0.0
        %736 = vmatpush.xpose.msra.mxu0 0.0
        %737 = vmatpush.xpose.msra.mxu0 0.0
        %738 = vmatpush.xpose.msra.mxu0 0.0
        %739 = vmatpush.xpose.msra.mxu0 0.0
        %740 = vmatpush.xpose.msra.mxu0 0.0
        %741 = vmatpush.xpose.msra.mxu0 0.0
        %742 = vmatpush.xpose.msra.mxu0 0.0
        %743 = vmatpush.xpose.msra.mxu0 0.0
        %744 = vmatpush.xpose.msra.mxu0 0.0
        %745 = vmatpush.xpose.msra.mxu0 0.0
        %746 = vmatpush.xpose.msra.mxu0 %v729
        %747 = vmatmul.f32.gmra.mxu0 %v727
        %v748 = vpop.f32.mrf.mxu0
        %v749 = vadd.f32 0.0, %v748
        %750 = vdwg.mxu0
        %752 = vrot.lane.b32.xlu0 %v709, 96
        %v753 = vpop.permute.xlu0 %752
        %v754 = vsel %vm726, %v709, 0
        %v756 = vsel %vm726, %v753, 0
        %758 = vmatpush.xpose.msra.mxu0 0.0
        %759 = vmatpush.xpose.msra.mxu0 0.0
        %760 = vmatpush.xpose.msra.mxu0 0.0
        %761 = vmatpush.xpose.msra.mxu0 0.0
        %762 = vmatpush.xpose.msra.mxu0 0.0
        %763 = vmatpush.xpose.msra.mxu0 0.0
        %764 = vmatpush.xpose.msra.mxu0 0.0
        %765 = vmatpush.xpose.msra.mxu0 0.0
        %766 = vmatpush.xpose.msra.mxu0 0.0
        %767 = vmatpush.xpose.msra.mxu0 0.0
        %768 = vmatpush.xpose.msra.mxu0 0.0
        %769 = vmatpush.xpose.msra.mxu0 0.0
        %770 = vmatpush.xpose.msra.mxu0 0.0
        %771 = vmatpush.xpose.msra.mxu0 0.0
        %772 = vmatpush.xpose.msra.mxu0 0.0
        %773 = vmatpush.xpose.msra.mxu0 %v756
        %774 = vmatmul.f32.gmra.mxu0 %v754
        %v775 = vpop.f32.mrf.mxu0
        %v776 = vadd.f32 0.0, %v775
        %777 = vdwg.mxu0
        %779 = vrot.lane.b32.xlu0 %v712, 96
        %v780 = vpop.permute.xlu0 %779
        %v781 = vsel %vm726, %v712, 0
        %v783 = vsel %vm726, %v780, 0
        %785 = vmatpush.xpose.msra.mxu0 0.0
        %786 = vmatpush.xpose.msra.mxu0 0.0
        %787 = vmatpush.xpose.msra.mxu0 0.0
        %788 = vmatpush.xpose.msra.mxu0 0.0
        %789 = vmatpush.xpose.msra.mxu0 0.0
        %790 = vmatpush.xpose.msra.mxu0 0.0
        %791 = vmatpush.xpose.msra.mxu0 0.0
        %792 = vmatpush.xpose.msra.mxu0 0.0
        %793 = vmatpush.xpose.msra.mxu0 0.0
        %794 = vmatpush.xpose.msra.mxu0 0.0
        %795 = vmatpush.xpose.msra.mxu0 0.0
        %796 = vmatpush.xpose.msra.mxu0 0.0
        %797 = vmatpush.xpose.msra.mxu0 0.0
        %798 = vmatpush.xpose.msra.mxu0 0.0
        %799 = vmatpush.xpose.msra.mxu0 0.0
        %800 = vmatpush.xpose.msra.mxu0 %v783
        %801 = vmatmul.f32.gmra.mxu0 %v781
        %v802 = vpop.f32.mrf.mxu0
        %v803 = vadd.f32 0.0, %v802
        %804 = vdwg.mxu0
        %806 = vrot.lane.b32.xlu0 %v715, 96
        %v807 = vpop.permute.xlu0 %806
        %v808 = vsel %vm726, %v715, 0
        %v810 = vsel %vm726, %v807, 0
        %812 = vmatpush.xpose.msra.mxu0 0.0
        %813 = vmatpush.xpose.msra.mxu0 0.0
        %814 = vmatpush.xpose.msra.mxu0 0.0
        %815 = vmatpush.xpose.msra.mxu0 0.0
        %816 = vmatpush.xpose.msra.mxu0 0.0
        %817 = vmatpush.xpose.msra.mxu0 0.0
        %818 = vmatpush.xpose.msra.mxu0 0.0
        %819 = vmatpush.xpose.msra.mxu0 0.0
        %820 = vmatpush.xpose.msra.mxu0 0.0
        %821 = vmatpush.xpose.msra.mxu0 0.0
        %822 = vmatpush.xpose.msra.mxu0 0.0
        %823 = vmatpush.xpose.msra.mxu0 0.0
        %824 = vmatpush.xpose.msra.mxu0 0.0
        %825 = vmatpush.xpose.msra.mxu0 0.0
        %826 = vmatpush.xpose.msra.mxu0 0.0
        %827 = vmatpush.xpose.msra.mxu0 %v810
        %828 = vmatmul.f32.gmra.mxu0 %v808
        %v829 = vpop.f32.mrf.mxu0
        %v830 = vadd.f32 0.0, %v829
        %831 = vdwg.mxu0
        %v832 = vmul.f32 %v749, 0.35355338
        %v833 = vmul.f32 %v776, 0.35355338
        %v834 = vmul.f32 %v803, 0.35355338
        %v835 = vmul.f32 %v830, 0.35355338
        %v836 = vadd.f32 %v832, %v722
        %v837 = vadd.f32 %v833, %v722
        %v838 = vadd.f32 %v834, %v722
        %v839 = vadd.f32 %v835, %v722
        %v840 = vsel %vm726, %v836, -inf
        %841 = vmax.xlane.f32.xlu0 %v840
        %v842 = vpop.xlane.xlu0 %841
        %v843 = vsel %vm726, %v837, -inf
        %844 = vmax.xlane.f32.xlu0 %v843
        %v845 = vpop.xlane.xlu0 %844
        %v846 = vsel %vm726, %v838, -inf
        %847 = vmax.xlane.f32.xlu0 %v846
        %v848 = vpop.xlane.xlu0 %847
        %v849 = vsel %vm726, %v839, -inf
        %850 = vmax.xlane.f32.xlu0 %v849
        %v851 = vpop.xlane.xlu0 %850
        %v852 = vsub.f32 %v836, %v842
        %v853 = vsub.f32 %v837, %v845
        %v854 = vsub.f32 %v838, %v848
        %v855 = vsub.f32 %v839, %v851
        %v856 = vmul.f32 %v852, 1.442695
        %v857 = vpow.pop %v856
        %v858 = vmul.f32 %v853, 1.442695
        %v859 = vpow.pop %v858
        %v860 = vmul.f32 %v854, 1.442695
        %v861 = vpow.pop %v860
        %v862 = vmul.f32 %v855, 1.442695
        %v863 = vpow.pop %v862
        %v864 = vsel %vm726, %v857, 0.0
        %865 = vadd.xlane.f32.xlu0 %v864
        %v866 = vpop.xlane.xlu0 %865
        %v867 = vsel %vm726, %v859, 0.0
        %868 = vadd.xlane.f32.xlu0 %v867
        %v869 = vpop.xlane.xlu0 %868
        %v870 = vsel %vm726, %v861, 0.0
        %871 = vadd.xlane.f32.xlu0 %v870
        %v872 = vpop.xlane.xlu0 %871
        %v873 = vsel %vm726, %v863, 0.0
        %874 = vadd.xlane.f32.xlu0 %v873
        %v875 = vpop.xlane.xlu0 %874
        %v876 = vrcp.pop %v866
        %v877 = vrcp.pop %v869
        %v878 = vrcp.pop %v872
        %v879 = vrcp.pop %v875
        %v880 = vmul.f32 %v857, %v876
        %v881 = vmul.f32 %v859, %v877
        %v882 = vmul.f32 %v861, %v878
        %v883 = vmul.f32 %v863, %v879
        %884 = vrot.lane.b32.xlu0 %v706, 64
        %v885 = vpop.permute.xlu0 %884
        %v888 = vsel %vm726, %v880, 0
        %890 = vmatpush.msra.mxu0 0.0
        %891 = vmatpush.msra.mxu0 0.0
        %892 = vmatpush.msra.mxu0 0.0
        %893 = vmatpush.msra.mxu0 0.0
        %894 = vmatpush.msra.mxu0 0.0
        %895 = vmatpush.msra.mxu0 0.0
        %896 = vmatpush.msra.mxu0 0.0
        %897 = vmatpush.msra.mxu0 0.0
        %898 = vmatpush.msra.mxu0 0.0
        %899 = vmatpush.msra.mxu0 0.0
        %900 = vmatpush.msra.mxu0 0.0
        %901 = vmatpush.msra.mxu0 0.0
        %902 = vmatpush.msra.mxu0 0.0
        %903 = vmatpush.msra.mxu0 0.0
        %904 = vmatpush.msra.mxu0 0.0
        %905 = vmatpush.msra.mxu0 %v885
        %906 = vmatmul.f32.gmra.mxu0 %v888
        %v907 = vpop.f32.mrf.mxu0
        %v908 = vadd.f32 0.0, %v907
        %909 = vdwg.mxu0
        %910 = vrot.lane.b32.xlu0 %v709, 64
        %v911 = vpop.permute.xlu0 %910
        %v914 = vsel %vm726, %v881, 0
        %916 = vmatpush.msra.mxu0 0.0
        %917 = vmatpush.msra.mxu0 0.0
        %918 = vmatpush.msra.mxu0 0.0
        %919 = vmatpush.msra.mxu0 0.0
        %920 = vmatpush.msra.mxu0 0.0
        %921 = vmatpush.msra.mxu0 0.0
        %922 = vmatpush.msra.mxu0 0.0
        %923 = vmatpush.msra.mxu0 0.0
        %924 = vmatpush.msra.mxu0 0.0
        %925 = vmatpush.msra.mxu0 0.0
        %926 = vmatpush.msra.mxu0 0.0
        %927 = vmatpush.msra.mxu0 0.0
        %928 = vmatpush.msra.mxu0 0.0
        %929 = vmatpush.msra.mxu0 0.0
        %930 = vmatpush.msra.mxu0 0.0
        %931 = vmatpush.msra.mxu0 %v911
        %932 = vmatmul.f32.gmra.mxu0 %v914
        %v933 = vpop.f32.mrf.mxu0
        %v934 = vadd.f32 0.0, %v933
        %935 = vdwg.mxu0
        %936 = vrot.lane.b32.xlu0 %v712, 64
        %v937 = vpop.permute.xlu0 %936
        %v940 = vsel %vm726, %v882, 0
        %942 = vmatpush.msra.mxu0 0.0
        %943 = vmatpush.msra.mxu0 0.0
        %944 = vmatpush.msra.mxu0 0.0
        %945 = vmatpush.msra.mxu0 0.0
        %946 = vmatpush.msra.mxu0 0.0
        %947 = vmatpush.msra.mxu0 0.0
        %948 = vmatpush.msra.mxu0 0.0
        %949 = vmatpush.msra.mxu0 0.0
        %950 = vmatpush.msra.mxu0 0.0
        %951 = vmatpush.msra.mxu0 0.0
        %952 = vmatpush.msra.mxu0 0.0
        %953 = vmatpush.msra.mxu0 0.0
        %954 = vmatpush.msra.mxu0 0.0
        %955 = vmatpush.msra.mxu0 0.0
        %956 = vmatpush.msra.mxu0 0.0
        %957 = vmatpush.msra.mxu0 %v937
        %958 = vmatmul.f32.gmra.mxu0 %v940
        %v959 = vpop.f32.mrf.mxu0
        %v960 = vadd.f32 0.0, %v959
        %961 = vdwg.mxu0
        %962 = vrot.lane.b32.xlu0 %v715, 64
        %v963 = vpop.permute.xlu0 %962
        %v966 = vsel %vm726, %v883, 0
        %968 = vmatpush.msra.mxu0 0.0
        %969 = vmatpush.msra.mxu0 0.0
        %970 = vmatpush.msra.mxu0 0.0
        %971 = vmatpush.msra.mxu0 0.0
        %972 = vmatpush.msra.mxu0 0.0
        %973 = vmatpush.msra.mxu0 0.0
        %974 = vmatpush.msra.mxu0 0.0
        %975 = vmatpush.msra.mxu0 0.0
        %976 = vmatpush.msra.mxu0 0.0
        %977 = vmatpush.msra.mxu0 0.0
        %978 = vmatpush.msra.mxu0 0.0
        %979 = vmatpush.msra.mxu0 0.0
        %980 = vmatpush.msra.mxu0 0.0
        %981 = vmatpush.msra.mxu0 0.0
        %982 = vmatpush.msra.mxu0 0.0
        %983 = vmatpush.msra.mxu0 %v963
        %984 = vmatmul.f32.gmra.mxu0 %v966
        %v985 = vpop.f32.mrf.mxu0
        %v986 = vadd.f32 0.0, %v985
        %987 = vdwg.mxu0
        %v988 = vld [vmem:[#allocation8] sm:$0xff]
        %989 = vrot.lane.b32.xlu0 %v706, 120
        %v990 = vpop.permute.xlu0 %989
        %991 = vrot.lane.b32.xlu0 %v706, 88
        %v992 = vpop.permute.xlu0 %991
        %v993 = vsel %vm726, %v990, 0
        %v995 = vsel %vm726, %v992, 0
        %997 = vmatpush.xpose.msra.mxu0 0.0
        %998 = vmatpush.xpose.msra.mxu0 0.0
        %999 = vmatpush.xpose.msra.mxu0 0.0
        %1000 = vmatpush.xpose.msra.mxu0 0.0
        %1001 = vmatpush.xpose.msra.mxu0 0.0
        %1002 = vmatpush.xpose.msra.mxu0 0.0
        %1003 = vmatpush.xpose.msra.mxu0 0.0
        %1004 = vmatpush.xpose.msra.mxu0 0.0
        %1005 = vmatpush.xpose.msra.mxu0 0.0
        %1006 = vmatpush.xpose.msra.mxu0 0.0
        %1007 = vmatpush.xpose.msra.mxu0 0.0
        %1008 = vmatpush.xpose.msra.mxu0 0.0
        %1009 = vmatpush.xpose.msra.mxu0 0.0
        %1010 = vmatpush.xpose.msra.mxu0 0.0
        %1011 = vmatpush.xpose.msra.mxu0 0.0
        %1012 = vmatpush.xpose.msra.mxu0 %v995
        %1013 = vmatmul.f32.gmra.mxu0 %v993
        %v1014 = vpop.f32.mrf.mxu0
        %v1015 = vadd.f32 0.0, %v1014
        %1016 = vdwg.mxu0
        %1017 = vrot.lane.b32.xlu0 %v709, 120
        %v1018 = vpop.permute.xlu0 %1017
        %1019 = vrot.lane.b32.xlu0 %v709, 88
        %v1020 = vpop.permute.xlu0 %1019
        %v1021 = vsel %vm726, %v1018, 0
        %v1023 = vsel %vm726, %v1020, 0
        %1025 = vmatpush.xpose.msra.mxu0 0.0
        %1026 = vmatpush.xpose.msra.mxu0 0.0
        %1027 = vmatpush.xpose.msra.mxu0 0.0
        %1028 = vmatpush.xpose.msra.mxu0 0.0
        %1029 = vmatpush.xpose.msra.mxu0 0.0
        %1030 = vmatpush.xpose.msra.mxu0 0.0
        %1031 = vmatpush.xpose.msra.mxu0 0.0
        %1032 = vmatpush.xpose.msra.mxu0 0.0
        %1033 = vmatpush.xpose.msra.mxu0 0.0
        %1034 = vmatpush.xpose.msra.mxu0 0.0
        %1035 = vmatpush.xpose.msra.mxu0 0.0
        %1036 = vmatpush.xpose.msra.mxu0 0.0
        %1037 = vmatpush.xpose.msra.mxu0 0.0
        %1038 = vmatpush.xpose.msra.mxu0 0.0
        %1039 = vmatpush.xpose.msra.mxu0 0.0
        %1040 = vmatpush.xpose.msra.mxu0 %v1023
        %1041 = vmatmul.f32.gmra.mxu0 %v1021
        %v1042 = vpop.f32.mrf.mxu0
        %v1043 = vadd.f32 0.0, %v1042
        %1044 = vdwg.mxu0
        %1045 = vrot.lane.b32.xlu0 %v712, 120
        %v1046 = vpop.permute.xlu0 %1045
        %1047 = vrot.lane.b32.xlu0 %v712, 88
        %v1048 = vpop.permute.xlu0 %1047
        %v1049 = vsel %vm726, %v1046, 0
        %v1051 = vsel %vm726, %v1048, 0
        %1053 = vmatpush.xpose.msra.mxu0 0.0
        %1054 = vmatpush.xpose.msra.mxu0 0.0
        %1055 = vmatpush.xpose.msra.mxu0 0.0
        %1056 = vmatpush.xpose.msra.mxu0 0.0
        %1057 = vmatpush.xpose.msra.mxu0 0.0
        %1058 = vmatpush.xpose.msra.mxu0 0.0
        %1059 = vmatpush.xpose.msra.mxu0 0.0
        %1060 = vmatpush.xpose.msra.mxu0 0.0
        %1061 = vmatpush.xpose.msra.mxu0 0.0
        %1062 = vmatpush.xpose.msra.mxu0 0.0
        %1063 = vmatpush.xpose.msra.mxu0 0.0
        %1064 = vmatpush.xpose.msra.mxu0 0.0
        %1065 = vmatpush.xpose.msra.mxu0 0.0
        %1066 = vmatpush.xpose.msra.mxu0 0.0
        %1067 = vmatpush.xpose.msra.mxu0 0.0
        %1068 = vmatpush.xpose.msra.mxu0 %v1051
        %1069 = vmatmul.f32.gmra.mxu0 %v1049
        %v1070 = vpop.f32.mrf.mxu0
        %v1071 = vadd.f32 0.0, %v1070
        %1072 = vdwg.mxu0
        %1073 = vrot.lane.b32.xlu0 %v715, 120
        %v1074 = vpop.permute.xlu0 %1073
        %1075 = vrot.lane.b32.xlu0 %v715, 88
        %v1076 = vpop.permute.xlu0 %1075
        %v1077 = vsel %vm726, %v1074, 0
        %v1079 = vsel %vm726, %v1076, 0
        %1081 = vmatpush.xpose.msra.mxu0 0.0
        %1082 = vmatpush.xpose.msra.mxu0 0.0
        %1083 = vmatpush.xpose.msra.mxu0 0.0
        %1084 = vmatpush.xpose.msra.mxu0 0.0
        %1085 = vmatpush.xpose.msra.mxu0 0.0
        %1086 = vmatpush.xpose.msra.mxu0 0.0
        %1087 = vmatpush.xpose.msra.mxu0 0.0
        %1088 = vmatpush.xpose.msra.mxu0 0.0
        %1089 = vmatpush.xpose.msra.mxu0 0.0
        %1090 = vmatpush.xpose.msra.mxu0 0.0
        %1091 = vmatpush.xpose.msra.mxu0 0.0
        %1092 = vmatpush.xpose.msra.mxu0 0.0
        %1093 = vmatpush.xpose.msra.mxu0 0.0
        %1094 = vmatpush.xpose.msra.mxu0 0.0
        %1095 = vmatpush.xpose.msra.mxu0 0.0
        %1096 = vmatpush.xpose.msra.mxu0 %v1079
        %1097 = vmatmul.f32.gmra.mxu0 %v1077
        %v1098 = vpop.f32.mrf.mxu0
        %v1099 = vadd.f32 0.0, %v1098
        %1100 = vdwg.mxu0
        %v1101 = vmul.f32 %v1015, 0.35355338
        %v1102 = vmul.f32 %v1043, 0.35355338
        %v1103 = vmul.f32 %v1071, 0.35355338
        %v1104 = vmul.f32 %v1099, 0.35355338
        %v1105 = vadd.f32 %v1101, %v722
        %v1106 = vadd.f32 %v1102, %v722
        %v1107 = vadd.f32 %v1103, %v722
        %v1108 = vadd.f32 %v1104, %v722
        %v1109 = vsel %vm726, %v1105, -inf
        %1110 = vmax.xlane.f32.xlu0 %v1109
        %v1111 = vpop.xlane.xlu0 %1110
        %v1112 = vsel %vm726, %v1106, -inf
        %1113 = vmax.xlane.f32.xlu0 %v1112
        %v1114 = vpop.xlane.xlu0 %1113
        %v1115 = vsel %vm726, %v1107, -inf
        %1116 = vmax.xlane.f32.xlu0 %v1115
        %v1117 = vpop.xlane.xlu0 %1116
        %v1118 = vsel %vm726, %v1108, -inf
        %1119 = vmax.xlane.f32.xlu0 %v1118
        %v1120 = vpop.xlane.xlu0 %1119
        %v1121 = vsub.f32 %v1105, %v1111
        %v1122 = vsub.f32 %v1106, %v1114
        %v1123 = vsub.f32 %v1107, %v1117
        %v1124 = vsub.f32 %v1108, %v1120
        %v1125 = vmul.f32 %v1121, 1.442695
        %v1126 = vpow.pop %v1125
        %v1127 = vmul.f32 %v1122, 1.442695
        %v1128 = vpow.pop %v1127
        %v1129 = vmul.f32 %v1123, 1.442695
        %v1130 = vpow.pop %v1129
        %v1131 = vmul.f32 %v1124, 1.442695
        %v1132 = vpow.pop %v1131
        %v1133 = vsel %vm726, %v1126, 0.0
        %1134 = vadd.xlane.f32.xlu0 %v1133
        %v1135 = vpop.xlane.xlu0 %1134
        %v1136 = vsel %vm726, %v1128, 0.0
        %1137 = vadd.xlane.f32.xlu0 %v1136
        %v1138 = vpop.xlane.xlu0 %1137
        %v1139 = vsel %vm726, %v1130, 0.0
        %1140 = vadd.xlane.f32.xlu0 %v1139
        %v1141 = vpop.xlane.xlu0 %1140
        %v1142 = vsel %vm726, %v1132, 0.0
        %1143 = vadd.xlane.f32.xlu0 %v1142
        %v1144 = vpop.xlane.xlu0 %1143
        %v1145 = vrcp.pop %v1135
        %v1146 = vrcp.pop %v1138
        %v1147 = vrcp.pop %v1141
        %v1148 = vrcp.pop %v1144
        %v1149 = vmul.f32 %v1126, %v1145
        %v1150 = vmul.f32 %v1128, %v1146
        %v1151 = vmul.f32 %v1130, %v1147
        %v1152 = vmul.f32 %v1132, %v1148
        %1153 = vrot.lane.b32.xlu0 %v706, 56
        %v1154 = vpop.permute.xlu0 %1153
        %v1157 = vsel %vm726, %v1149, 0
        %1159 = vmatpush.msra.mxu0 0.0
        %1160 = vmatpush.msra.mxu0 0.0
        %1161 = vmatpush.msra.mxu0 0.0
        %1162 = vmatpush.msra.mxu0 0.0
        %1163 = vmatpush.msra.mxu0 0.0
        %1164 = vmatpush.msra.mxu0 0.0
        %1165 = vmatpush.msra.mxu0 0.0
        %1166 = vmatpush.msra.mxu0 0.0
        %1167 = vmatpush.msra.mxu0 0.0
        %1168 = vmatpush.msra.mxu0 0.0
        %1169 = vmatpush.msra.mxu0 0.0
        %1170 = vmatpush.msra.mxu0 0.0
        %1171 = vmatpush.msra.mxu0 0.0
        %1172 = vmatpush.msra.mxu0 0.0
        %1173 = vmatpush.msra.mxu0 0.0
        %1174 = vmatpush.msra.mxu0 %v1154
        %1175 = vmatmul.f32.gmra.mxu0 %v1157
        %v1176 = vpop.f32.mrf.mxu0
        %v1177 = vadd.f32 0.0, %v1176
        %1178 = vdwg.mxu0
        %1179 = vrot.lane.b32.xlu0 %v709, 56
        %v1180 = vpop.permute.xlu0 %1179
        %v1183 = vsel %vm726, %v1150, 0
        %1185 = vmatpush.msra.mxu0 0.0
        %1186 = vmatpush.msra.mxu0 0.0
        %1187 = vmatpush.msra.mxu0 0.0
        %1188 = vmatpush.msra.mxu0 0.0
        %1189 = vmatpush.msra.mxu0 0.0
        %1190 = vmatpush.msra.mxu0 0.0
        %1191 = vmatpush.msra.mxu0 0.0
        %1192 = vmatpush.msra.mxu0 0.0
        %1193 = vmatpush.msra.mxu0 0.0
        %1194 = vmatpush.msra.mxu0 0.0
        %1195 = vmatpush.msra.mxu0 0.0
        %1196 = vmatpush.msra.mxu0 0.0
        %1197 = vmatpush.msra.mxu0 0.0
        %1198 = vmatpush.msra.mxu0 0.0
        %1199 = vmatpush.msra.mxu0 0.0
        %1200 = vmatpush.msra.mxu0 %v1180
        %1201 = vmatmul.f32.gmra.mxu0 %v1183
        %v1202 = vpop.f32.mrf.mxu0
        %v1203 = vadd.f32 0.0, %v1202
        %1204 = vdwg.mxu0
        %1205 = vrot.lane.b32.xlu0 %v712, 56
        %v1206 = vpop.permute.xlu0 %1205
        %v1209 = vsel %vm726, %v1151, 0
        %1211 = vmatpush.msra.mxu0 0.0
        %1212 = vmatpush.msra.mxu0 0.0
        %1213 = vmatpush.msra.mxu0 0.0
        %1214 = vmatpush.msra.mxu0 0.0
        %1215 = vmatpush.msra.mxu0 0.0
        %1216 = vmatpush.msra.mxu0 0.0
        %1217 = vmatpush.msra.mxu0 0.0
        %1218 = vmatpush.msra.mxu0 0.0
        %1219 = vmatpush.msra.mxu0 0.0
        %1220 = vmatpush.msra.mxu0 0.0
        %1221 = vmatpush.msra.mxu0 0.0
        %1222 = vmatpush.msra.mxu0 0.0
        %1223 = vmatpush.msra.mxu0 0.0
        %1224 = vmatpush.msra.mxu0 0.0
        %1225 = vmatpush.msra.mxu0 0.0
        %1226 = vmatpush.msra.mxu0 %v1206
        %1227 = vmatmul.f32.gmra.mxu0 %v1209
        %v1228 = vpop.f32.mrf.mxu0
        %v1229 = vadd.f32 0.0, %v1228
        %1230 = vdwg.mxu0
        %1231 = vrot.lane.b32.xlu0 %v715, 56
        %v1232 = vpop.permute.xlu0 %1231
        %v1235 = vsel %vm726, %v1152, 0
        %1237 = vmatpush.msra.mxu0 0.0
        %1238 = vmatpush.msra.mxu0 0.0
        %1239 = vmatpush.msra.mxu0 0.0
        %1240 = vmatpush.msra.mxu0 0.0
        %1241 = vmatpush.msra.mxu0 0.0
        %1242 = vmatpush.msra.mxu0 0.0
        %1243 = vmatpush.msra.mxu0 0.0
        %1244 = vmatpush.msra.mxu0 0.0
        %1245 = vmatpush.msra.mxu0 0.0
        %1246 = vmatpush.msra.mxu0 0.0
        %1247 = vmatpush.msra.mxu0 0.0
        %1248 = vmatpush.msra.mxu0 0.0
        %1249 = vmatpush.msra.mxu0 0.0
        %1250 = vmatpush.msra.mxu0 0.0
        %1251 = vmatpush.msra.mxu0 0.0
        %1252 = vmatpush.msra.mxu0 %v1232
        %1253 = vmatmul.f32.gmra.mxu0 %v1235
        %v1254 = vpop.f32.mrf.mxu0
        %v1255 = vadd.f32 0.0, %v1254
        %1256 = vdwg.mxu0
        %v1257 = vld [vmem:[#allocation8 + $0x8] sm:$0xff]
        %v1259 = vsel %vm726, %v1177, 0
        %v1262 = vsel %vm726, %v1203, 0
        %v1265 = vsel %vm726, %v1229, 0
        %v1268 = vsel %vm726, %v1255, 0
        %1270 = vmatpush.msra.mxu0 0.0
        %1271 = vmatpush.msra.mxu0 0.0
        %1272 = vmatpush.msra.mxu0 0.0
        %1273 = vmatpush.msra.mxu0 0.0
        %1274 = vmatpush.msra.mxu0 0.0
        %1275 = vmatpush.msra.mxu0 0.0
        %1276 = vmatpush.msra.mxu0 0.0
        %1277 = vmatpush.msra.mxu0 0.0
        %1278 = vmatpush.msra.mxu0 0.0
        %1279 = vmatpush.msra.mxu0 0.0
        %1280 = vmatpush.msra.mxu0 0.0
        %1281 = vmatpush.msra.mxu0 0.0
        %1282 = vmatpush.msra.mxu0 0.0
        %1283 = vmatpush.msra.mxu0 0.0
        %1284 = vmatpush.msra.mxu0 0.0
        %1285 = vmatpush.msra.mxu0 %v1257
        %1286 = vmatmul.f32.gmra.mxu0 %v1259
        %v1287 = vpop.f32.mrf.mxu0
        %v1288 = vadd.f32 0.0, %v1287
        %1289 = vmatmul.f32.gmra.mxu0 %v1262
        %v1290 = vpop.f32.mrf.mxu0
        %v1291 = vadd.f32 0.0, %v1290
        %1292 = vmatmul.f32.gmra.mxu0 %v1265
        %v1293 = vpop.f32.mrf.mxu0
        %v1294 = vadd.f32 0.0, %v1293
        %1295 = vmatmul.f32.gmra.mxu0 %v1268
        %v1296 = vpop.f32.mrf.mxu0
        %v1297 = vadd.f32 0.0, %v1296
        %1298 = vdwg.mxu0
        %v1300 = vsel %vm726, %v908, 0
        %v1303 = vsel %vm726, %v934, 0
        %v1306 = vsel %vm726, %v960, 0
        %v1309 = vsel %vm726, %v986, 0
        %1311 = vmatpush.msra.mxu0 0.0
        %1312 = vmatpush.msra.mxu0 0.0
        %1313 = vmatpush.msra.mxu0 0.0
        %1314 = vmatpush.msra.mxu0 0.0
        %1315 = vmatpush.msra.mxu0 0.0
        %1316 = vmatpush.msra.mxu0 0.0
        %1317 = vmatpush.msra.mxu0 0.0
        %1318 = vmatpush.msra.mxu0 0.0
        %1319 = vmatpush.msra.mxu0 0.0
        %1320 = vmatpush.msra.mxu0 0.0
        %1321 = vmatpush.msra.mxu0 0.0
        %1322 = vmatpush.msra.mxu0 0.0
        %1323 = vmatpush.msra.mxu0 0.0
        %1324 = vmatpush.msra.mxu0 0.0
        %1325 = vmatpush.msra.mxu0 0.0
        %1326 = vmatpush.msra.mxu0 %v988
        %1327 = vmatmul.f32.gmra.mxu0 %v1300
        %v1328 = vpop.f32.mrf.mxu0
        %v1329 = vadd.f32 %v1288, %v1328
        %1330 = vmatmul.f32.gmra.mxu0 %v1303
        %v1331 = vpop.f32.mrf.mxu0
        %v1332 = vadd.f32 %v1291, %v1331
        %1333 = vmatmul.f32.gmra.mxu0 %v1306
        %v1334 = vpop.f32.mrf.mxu0
        %v1335 = vadd.f32 %v1294, %v1334
        %1336 = vmatmul.f32.gmra.mxu0 %v1309
        %v1337 = vpop.f32.mrf.mxu0
        %v1338 = vadd.f32 %v1297, %v1337
        %1339 = vdwg.mxu0
        %1340 = vrot.lane.b32.xlu0 %v706, 112
        %v1341 = vpop.permute.xlu0 %1340
        %1342 = vrot.lane.b32.xlu0 %v706, 80
        %v1343 = vpop.permute.xlu0 %1342
        %v1344 = vsel %vm726, %v1341, 0
        %v1346 = vsel %vm726, %v1343, 0
        %1348 = vmatpush.xpose.msra.mxu0 0.0
        %1349 = vmatpush.xpose.msra.mxu0 0.0
        %1350 = vmatpush.xpose.msra.mxu0 0.0
        %1351 = vmatpush.xpose.msra.mxu0 0.0
        %1352 = vmatpush.xpose.msra.mxu0 0.0
        %1353 = vmatpush.xpose.msra.mxu0 0.0
        %1354 = vmatpush.xpose.msra.mxu0 0.0
        %1355 = vmatpush.xpose.msra.mxu0 0.0
        %1356 = vmatpush.xpose.msra.mxu0 0.0
        %1357 = vmatpush.xpose.msra.mxu0 0.0
        %1358 = vmatpush.xpose.msra.mxu0 0.0
        %1359 = vmatpush.xpose.msra.mxu0 0.0
        %1360 = vmatpush.xpose.msra.mxu0 0.0
        %1361 = vmatpush.xpose.msra.mxu0 0.0
        %1362 = vmatpush.xpose.msra.mxu0 0.0
        %1363 = vmatpush.xpose.msra.mxu0 %v1346
        %1364 = vmatmul.f32.gmra.mxu0 %v1344
        %v1365 = vpop.f32.mrf.mxu0
        %v1366 = vadd.f32 0.0, %v1365
        %1367 = vdwg.mxu0
        %1368 = vrot.lane.b32.xlu0 %v709, 112
        %v1369 = vpop.permute.xlu0 %1368
        %1370 = vrot.lane.b32.xlu0 %v709, 80
        %v1371 = vpop.permute.xlu0 %1370
        %v1372 = vsel %vm726, %v1369, 0
        %v1374 = vsel %vm726, %v1371, 0
        %1376 = vmatpush.xpose.msra.mxu0 0.0
        %1377 = vmatpush.xpose.msra.mxu0 0.0
        %1378 = vmatpush.xpose.msra.mxu0 0.0
        %1379 = vmatpush.xpose.msra.mxu0 0.0
        %1380 = vmatpush.xpose.msra.mxu0 0.0
        %1381 = vmatpush.xpose.msra.mxu0 0.0
        %1382 = vmatpush.xpose.msra.mxu0 0.0
        %1383 = vmatpush.xpose.msra.mxu0 0.0
        %1384 = vmatpush.xpose.msra.mxu0 0.0
        %1385 = vmatpush.xpose.msra.mxu0 0.0
        %1386 = vmatpush.xpose.msra.mxu0 0.0
        %1387 = vmatpush.xpose.msra.mxu0 0.0
        %1388 = vmatpush.xpose.msra.mxu0 0.0
        %1389 = vmatpush.xpose.msra.mxu0 0.0
        %1390 = vmatpush.xpose.msra.mxu0 0.0
        %1391 = vmatpush.xpose.msra.mxu0 %v1374
        %1392 = vmatmul.f32.gmra.mxu0 %v1372
        %v1393 = vpop.f32.mrf.mxu0
        %v1394 = vadd.f32 0.0, %v1393
        %1395 = vdwg.mxu0
        %1396 = vrot.lane.b32.xlu0 %v712, 112
        %v1397 = vpop.permute.xlu0 %1396
        %1398 = vrot.lane.b32.xlu0 %v712, 80
        %v1399 = vpop.permute.xlu0 %1398
        %v1400 = vsel %vm726, %v1397, 0
        %v1402 = vsel %vm726, %v1399, 0
        %1404 = vmatpush.xpose.msra.mxu0 0.0
        %1405 = vmatpush.xpose.msra.mxu0 0.0
        %1406 = vmatpush.xpose.msra.mxu0 0.0
        %1407 = vmatpush.xpose.msra.mxu0 0.0
        %1408 = vmatpush.xpose.msra.mxu0 0.0
        %1409 = vmatpush.xpose.msra.mxu0 0.0
        %1410 = vmatpush.xpose.msra.mxu0 0.0
        %1411 = vmatpush.xpose.msra.mxu0 0.0
        %1412 = vmatpush.xpose.msra.mxu0 0.0
        %1413 = vmatpush.xpose.msra.mxu0 0.0
        %1414 = vmatpush.xpose.msra.mxu0 0.0
        %1415 = vmatpush.xpose.msra.mxu0 0.0
        %1416 = vmatpush.xpose.msra.mxu0 0.0
        %1417 = vmatpush.xpose.msra.mxu0 0.0
        %1418 = vmatpush.xpose.msra.mxu0 0.0
        %1419 = vmatpush.xpose.msra.mxu0 %v1402
        %1420 = vmatmul.f32.gmra.mxu0 %v1400
        %v1421 = vpop.f32.mrf.mxu0
        %v1422 = vadd.f32 0.0, %v1421
        %1423 = vdwg.mxu0
        %1424 = vrot.lane.b32.xlu0 %v715, 112
        %v1425 = vpop.permute.xlu0 %1424
        %1426 = vrot.lane.b32.xlu0 %v715, 80
        %v1427 = vpop.permute.xlu0 %1426
        %v1428 = vsel %vm726, %v1425, 0
        %v1430 = vsel %vm726, %v1427, 0
        %1432 = vmatpush.xpose.msra.mxu0 0.0
        %1433 = vmatpush.xpose.msra.mxu0 0.0
        %1434 = vmatpush.xpose.msra.mxu0 0.0
        %1435 = vmatpush.xpose.msra.mxu0 0.0
        %1436 = vmatpush.xpose.msra.mxu0 0.0
        %1437 = vmatpush.xpose.msra.mxu0 0.0
        %1438 = vmatpush.xpose.msra.mxu0 0.0
        %1439 = vmatpush.xpose.msra.mxu0 0.0
        %1440 = vmatpush.xpose.msra.mxu0 0.0
        %1441 = vmatpush.xpose.msra.mxu0 0.0
        %1442 = vmatpush.xpose.msra.mxu0 0.0
        %1443 = vmatpush.xpose.msra.mxu0 0.0
        %1444 = vmatpush.xpose.msra.mxu0 0.0
        %1445 = vmatpush.xpose.msra.mxu0 0.0
        %1446 = vmatpush.xpose.msra.mxu0 0.0
        %1447 = vmatpush.xpose.msra.mxu0 %v1430
        %1448 = vmatmul.f32.gmra.mxu0 %v1428
        %v1449 = vpop.f32.mrf.mxu0
        %v1450 = vadd.f32 0.0, %v1449
        %1451 = vdwg.mxu0
        %v1452 = vmul.f32 %v1366, 0.35355338
        %v1453 = vmul.f32 %v1394, 0.35355338
        %v1454 = vmul.f32 %v1422, 0.35355338
        %v1455 = vmul.f32 %v1450, 0.35355338
        %v1456 = vadd.f32 %v1452, %v722
        %v1457 = vadd.f32 %v1453, %v722
        %v1458 = vadd.f32 %v1454, %v722
        %v1459 = vadd.f32 %v1455, %v722
        %v1460 = vsel %vm726, %v1456, -inf
        %1461 = vmax.xlane.f32.xlu0 %v1460
        %v1462 = vpop.xlane.xlu0 %1461
        %v1463 = vsel %vm726, %v1457, -inf
        %1464 = vmax.xlane.f32.xlu0 %v1463
        %v1465 = vpop.xlane.xlu0 %1464
        %v1466 = vsel %vm726, %v1458, -inf
        %1467 = vmax.xlane.f32.xlu0 %v1466
        %v1468 = vpop.xlane.xlu0 %1467
        %v1469 = vsel %vm726, %v1459, -inf
        %1470 = vmax.xlane.f32.xlu0 %v1469
        %v1471 = vpop.xlane.xlu0 %1470
        %v1472 = vsub.f32 %v1456, %v1462
        %v1473 = vsub.f32 %v1457, %v1465
        %v1474 = vsub.f32 %v1458, %v1468
        %v1475 = vsub.f32 %v1459, %v1471
        %v1476 = vmul.f32 %v1472, 1.442695
        %v1477 = vpow.pop %v1476
        %v1478 = vmul.f32 %v1473, 1.442695
        %v1479 = vpow.pop %v1478
        %v1480 = vmul.f32 %v1474, 1.442695
        %v1481 = vpow.pop %v1480
        %v1482 = vmul.f32 %v1475, 1.442695
        %v1483 = vpow.pop %v1482
        %v1484 = vsel %vm726, %v1477, 0.0
        %1485 = vadd.xlane.f32.xlu0 %v1484
        %v1486 = vpop.xlane.xlu0 %1485
        %v1487 = vsel %vm726, %v1479, 0.0
        %1488 = vadd.xlane.f32.xlu0 %v1487
        %v1489 = vpop.xlane.xlu0 %1488
        %v1490 = vsel %vm726, %v1481, 0.0
        %1491 = vadd.xlane.f32.xlu0 %v1490
        %v1492 = vpop.xlane.xlu0 %1491
        %v1493 = vsel %vm726, %v1483, 0.0
        %1494 = vadd.xlane.f32.xlu0 %v1493
        %v1495 = vpop.xlane.xlu0 %1494
        %v1496 = vrcp.pop %v1486
        %v1497 = vrcp.pop %v1489
        %v1498 = vrcp.pop %v1492
        %v1499 = vrcp.pop %v1495
        %v1500 = vmul.f32 %v1477, %v1496
        %v1501 = vmul.f32 %v1479, %v1497
        %v1502 = vmul.f32 %v1481, %v1498
        %v1503 = vmul.f32 %v1483, %v1499
        %1504 = vrot.lane.b32.xlu0 %v706, 48
        %v1505 = vpop.permute.xlu0 %1504
        %v1508 = vsel %vm726, %v1500, 0
        %1510 = vmatpush.msra.mxu0 0.0
        %1511 = vmatpush.msra.mxu0 0.0
        %1512 = vmatpush.msra.mxu0 0.0
        %1513 = vmatpush.msra.mxu0 0.0
        %1514 = vmatpush.msra.mxu0 0.0
        %1515 = vmatpush.msra.mxu0 0.0
        %1516 = vmatpush.msra.mxu0 0.0
        %1517 = vmatpush.msra.mxu0 0.0
        %1518 = vmatpush.msra.mxu0 0.0
        %1519 = vmatpush.msra.mxu0 0.0
        %1520 = vmatpush.msra.mxu0 0.0
        %1521 = vmatpush.msra.mxu0 0.0
        %1522 = vmatpush.msra.mxu0 0.0
        %1523 = vmatpush.msra.mxu0 0.0
        %1524 = vmatpush.msra.mxu0 0.0
        %1525 = vmatpush.msra.mxu0 %v1505
        %1526 = vmatmul.f32.gmra.mxu0 %v1508
        %v1527 = vpop.f32.mrf.mxu0
        %v1528 = vadd.f32 0.0, %v1527
        %1529 = vdwg.mxu0
        %1530 = vrot.lane.b32.xlu0 %v709, 48
        %v1531 = vpop.permute.xlu0 %1530
        %v1534 = vsel %vm726, %v1501, 0
        %1536 = vmatpush.msra.mxu0 0.0
        %1537 = vmatpush.msra.mxu0 0.0
        %1538 = vmatpush.msra.mxu0 0.0
        %1539 = vmatpush.msra.mxu0 0.0
        %1540 = vmatpush.msra.mxu0 0.0
        %1541 = vmatpush.msra.mxu0 0.0
        %1542 = vmatpush.msra.mxu0 0.0
        %1543 = vmatpush.msra.mxu0 0.0
        %1544 = vmatpush.msra.mxu0 0.0
        %1545 = vmatpush.msra.mxu0 0.0
        %1546 = vmatpush.msra.mxu0 0.0
        %1547 = vmatpush.msra.mxu0 0.0
        %1548 = vmatpush.msra.mxu0 0.0
        %1549 = vmatpush.msra.mxu0 0.0
        %1550 = vmatpush.msra.mxu0 0.0
        %1551 = vmatpush.msra.mxu0 %v1531
        %1552 = vmatmul.f32.gmra.mxu0 %v1534
        %v1553 = vpop.f32.mrf.mxu0
        %v1554 = vadd.f32 0.0, %v1553
        %1555 = vdwg.mxu0
        %1556 = vrot.lane.b32.xlu0 %v712, 48
        %v1557 = vpop.permute.xlu0 %1556
        %v1560 = vsel %vm726, %v1502, 0
        %1562 = vmatpush.msra.mxu0 0.0
        %1563 = vmatpush.msra.mxu0 0.0
        %1564 = vmatpush.msra.mxu0 0.0
        %1565 = vmatpush.msra.mxu0 0.0
        %1566 = vmatpush.msra.mxu0 0.0
        %1567 = vmatpush.msra.mxu0 0.0
        %1568 = vmatpush.msra.mxu0 0.0
        %1569 = vmatpush.msra.mxu0 0.0
        %1570 = vmatpush.msra.mxu0 0.0
        %1571 = vmatpush.msra.mxu0 0.0
        %1572 = vmatpush.msra.mxu0 0.0
        %1573 = vmatpush.msra.mxu0 0.0
        %1574 = vmatpush.msra.mxu0 0.0
        %1575 = vmatpush.msra.mxu0 0.0
        %1576 = vmatpush.msra.mxu0 0.0
        %1577 = vmatpush.msra.mxu0 %v1557
        %1578 = vmatmul.f32.gmra.mxu0 %v1560
        %v1579 = vpop.f32.mrf.mxu0
        %v1580 = vadd.f32 0.0, %v1579
        %1581 = vdwg.mxu0
        %1582 = vrot.lane.b32.xlu0 %v715, 48
        %v1583 = vpop.permute.xlu0 %1582
        %v1586 = vsel %vm726, %v1503, 0
        %1588 = vmatpush.msra.mxu0 0.0
        %1589 = vmatpush.msra.mxu0 0.0
        %1590 = vmatpush.msra.mxu0 0.0
        %1591 = vmatpush.msra.mxu0 0.0
        %1592 = vmatpush.msra.mxu0 0.0
        %1593 = vmatpush.msra.mxu0 0.0
        %1594 = vmatpush.msra.mxu0 0.0
        %1595 = vmatpush.msra.mxu0 0.0
        %1596 = vmatpush.msra.mxu0 0.0
        %1597 = vmatpush.msra.mxu0 0.0
        %1598 = vmatpush.msra.mxu0 0.0
        %1599 = vmatpush.msra.mxu0 0.0
        %1600 = vmatpush.msra.mxu0 0.0
        %1601 = vmatpush.msra.mxu0 0.0
        %1602 = vmatpush.msra.mxu0 0.0
        %1603 = vmatpush.msra.mxu0 %v1583
        %1604 = vmatmul.f32.gmra.mxu0 %v1586
        %v1605 = vpop.f32.mrf.mxu0
        %v1606 = vadd.f32 0.0, %v1605
        %1607 = vdwg.mxu0
        %v1608 = vld [vmem:[#allocation8 + $0x10] sm:$0xff]
        %v1610 = vsel %vm726, %v1528, 0
        %v1613 = vsel %vm726, %v1554, 0
        %v1616 = vsel %vm726, %v1580, 0
        %v1619 = vsel %vm726, %v1606, 0
        %1621 = vmatpush.msra.mxu0 0.0
        %1622 = vmatpush.msra.mxu0 0.0
        %1623 = vmatpush.msra.mxu0 0.0
        %1624 = vmatpush.msra.mxu0 0.0
        %1625 = vmatpush.msra.mxu0 0.0
        %1626 = vmatpush.msra.mxu0 0.0
        %1627 = vmatpush.msra.mxu0 0.0
        %1628 = vmatpush.msra.mxu0 0.0
        %1629 = vmatpush.msra.mxu0 0.0
        %1630 = vmatpush.msra.mxu0 0.0
        %1631 = vmatpush.msra.mxu0 0.0
        %1632 = vmatpush.msra.mxu0 0.0
        %1633 = vmatpush.msra.mxu0 0.0
        %1634 = vmatpush.msra.mxu0 0.0
        %1635 = vmatpush.msra.mxu0 0.0
        %1636 = vmatpush.msra.mxu0 %v1608
        %1637 = vmatmul.f32.gmra.mxu0 %v1610
        %v1638 = vpop.f32.mrf.mxu0
        %v1639 = vadd.f32 0.0, %v1638
        %1640 = vmatmul.f32.gmra.mxu0 %v1613
        %v1641 = vpop.f32.mrf.mxu0
        %v1642 = vadd.f32 0.0, %v1641
        %1643 = vmatmul.f32.gmra.mxu0 %v1616
        %v1644 = vpop.f32.mrf.mxu0
        %v1645 = vadd.f32 0.0, %v1644
        %1646 = vmatmul.f32.gmra.mxu0 %v1619
        %v1647 = vpop.f32.mrf.mxu0
        %v1648 = vadd.f32 0.0, %v1647
        %1649 = vdwg.mxu0
        %v1650 = vadd.f32 %v1329, %v1639
        %v1651 = vadd.f32 %v1332, %v1642
        %v1652 = vadd.f32 %v1335, %v1645
        %v1653 = vadd.f32 %v1338, %v1648
        %1654 = vrot.lane.b32.xlu0 %v706, 104
        %v1655 = vpop.permute.xlu0 %1654
        %1656 = vrot.lane.b32.xlu0 %v706, 72
        %v1657 = vpop.permute.xlu0 %1656
        %v1658 = vsel %vm726, %v1655, 0
        %v1660 = vsel %vm726, %v1657, 0
        %1662 = vmatpush.xpose.msra.mxu0 0.0
        %1663 = vmatpush.xpose.msra.mxu0 0.0
        %1664 = vmatpush.xpose.msra.mxu0 0.0
        %1665 = vmatpush.xpose.msra.mxu0 0.0
        %1666 = vmatpush.xpose.msra.mxu0 0.0
        %1667 = vmatpush.xpose.msra.mxu0 0.0
        %1668 = vmatpush.xpose.msra.mxu0 0.0
        %1669 = vmatpush.xpose.msra.mxu0 0.0
        %1670 = vmatpush.xpose.msra.mxu0 0.0
        %1671 = vmatpush.xpose.msra.mxu0 0.0
        %1672 = vmatpush.xpose.msra.mxu0 0.0
        %1673 = vmatpush.xpose.msra.mxu0 0.0
        %1674 = vmatpush.xpose.msra.mxu0 0.0
        %1675 = vmatpush.xpose.msra.mxu0 0.0
        %1676 = vmatpush.xpose.msra.mxu0 0.0
        %1677 = vmatpush.xpose.msra.mxu0 %v1660
        %1678 = vmatmul.f32.gmra.mxu0 %v1658
        %v1679 = vpop.f32.mrf.mxu0
        %v1680 = vadd.f32 0.0, %v1679
        %1681 = vdwg.mxu0
        %1682 = vrot.lane.b32.xlu0 %v709, 104
        %v1683 = vpop.permute.xlu0 %1682
        %1684 = vrot.lane.b32.xlu0 %v709, 72
        %v1685 = vpop.permute.xlu0 %1684
        %v1686 = vsel %vm726, %v1683, 0
        %v1688 = vsel %vm726, %v1685, 0
        %1690 = vmatpush.xpose.msra.mxu0 0.0
        %1691 = vmatpush.xpose.msra.mxu0 0.0
        %1692 = vmatpush.xpose.msra.mxu0 0.0
        %1693 = vmatpush.xpose.msra.mxu0 0.0
        %1694 = vmatpush.xpose.msra.mxu0 0.0
        %1695 = vmatpush.xpose.msra.mxu0 0.0
        %1696 = vmatpush.xpose.msra.mxu0 0.0
        %1697 = vmatpush.xpose.msra.mxu0 0.0
        %1698 = vmatpush.xpose.msra.mxu0 0.0
        %1699 = vmatpush.xpose.msra.mxu0 0.0
        %1700 = vmatpush.xpose.msra.mxu0 0.0
        %1701 = vmatpush.xpose.msra.mxu0 0.0
        %1702 = vmatpush.xpose.msra.mxu0 0.0
        %1703 = vmatpush.xpose.msra.mxu0 0.0
        %1704 = vmatpush.xpose.msra.mxu0 0.0
        %1705 = vmatpush.xpose.msra.mxu0 %v1688
        %1706 = vmatmul.f32.gmra.mxu0 %v1686
        %v1707 = vpop.f32.mrf.mxu0
        %v1708 = vadd.f32 0.0, %v1707
        %1709 = vdwg.mxu0
        %1710 = vrot.lane.b32.xlu0 %v712, 104
        %v1711 = vpop.permute.xlu0 %1710
        %1712 = vrot.lane.b32.xlu0 %v712, 72
        %v1713 = vpop.permute.xlu0 %1712
        %v1714 = vsel %vm726, %v1711, 0
        %v1716 = vsel %vm726, %v1713, 0
        %1718 = vmatpush.xpose.msra.mxu0 0.0
        %1719 = vmatpush.xpose.msra.mxu0 0.0
        %1720 = vmatpush.xpose.msra.mxu0 0.0
        %1721 = vmatpush.xpose.msra.mxu0 0.0
        %1722 = vmatpush.xpose.msra.mxu0 0.0
        %1723 = vmatpush.xpose.msra.mxu0 0.0
        %1724 = vmatpush.xpose.msra.mxu0 0.0
        %1725 = vmatpush.xpose.msra.mxu0 0.0
        %1726 = vmatpush.xpose.msra.mxu0 0.0
        %1727 = vmatpush.xpose.msra.mxu0 0.0
        %1728 = vmatpush.xpose.msra.mxu0 0.0
        %1729 = vmatpush.xpose.msra.mxu0 0.0
        %1730 = vmatpush.xpose.msra.mxu0 0.0
        %1731 = vmatpush.xpose.msra.mxu0 0.0
        %1732 = vmatpush.xpose.msra.mxu0 0.0
        %1733 = vmatpush.xpose.msra.mxu0 %v1716
        %1734 = vmatmul.f32.gmra.mxu0 %v1714
        %v1735 = vpop.f32.mrf.mxu0
        %v1736 = vadd.f32 0.0, %v1735
        %1737 = vdwg.mxu0
        %1738 = vrot.lane.b32.xlu0 %v715, 104
        %v1739 = vpop.permute.xlu0 %1738
        %1740 = vrot.lane.b32.xlu0 %v715, 72
        %v1741 = vpop.permute.xlu0 %1740
        %v1742 = vsel %vm726, %v1739, 0
        %v1744 = vsel %vm726, %v1741, 0
        %1746 = vmatpush.xpose.msra.mxu0 0.0
        %1747 = vmatpush.xpose.msra.mxu0 0.0
        %1748 = vmatpush.xpose.msra.mxu0 0.0
        %1749 = vmatpush.xpose.msra.mxu0 0.0
        %1750 = vmatpush.xpose.msra.mxu0 0.0
        %1751 = vmatpush.xpose.msra.mxu0 0.0
        %1752 = vmatpush.xpose.msra.mxu0 0.0
        %1753 = vmatpush.xpose.msra.mxu0 0.0
        %1754 = vmatpush.xpose.msra.mxu0 0.0
        %1755 = vmatpush.xpose.msra.mxu0 0.0
        %1756 = vmatpush.xpose.msra.mxu0 0.0
        %1757 = vmatpush.xpose.msra.mxu0 0.0
        %1758 = vmatpush.xpose.msra.mxu0 0.0
        %1759 = vmatpush.xpose.msra.mxu0 0.0
        %1760 = vmatpush.xpose.msra.mxu0 0.0
        %1761 = vmatpush.xpose.msra.mxu0 %v1744
        %1762 = vmatmul.f32.gmra.mxu0 %v1742
        %v1763 = vpop.f32.mrf.mxu0
        %v1764 = vadd.f32 0.0, %v1763
        %1765 = vdwg.mxu0
        %v1766 = vmul.f32 %v1680, 0.35355338
        %v1767 = vmul.f32 %v1708, 0.35355338
        %v1768 = vmul.f32 %v1736, 0.35355338
        %v1769 = vmul.f32 %v1764, 0.35355338
        %v1770 = vadd.f32 %v1766, %v722
        %v1771 = vadd.f32 %v1767, %v722
        %v1772 = vadd.f32 %v1768, %v722
        %v1773 = vadd.f32 %v1769, %v722
        %v1774 = vsel %vm726, %v1770, -inf
        %1775 = vmax.xlane.f32.xlu0 %v1774
        %v1776 = vpop.xlane.xlu0 %1775
        %v1777 = vsel %vm726, %v1771, -inf
        %1778 = vmax.xlane.f32.xlu0 %v1777
        %v1779 = vpop.xlane.xlu0 %1778
        %v1780 = vsel %vm726, %v1772, -inf
        %1781 = vmax.xlane.f32.xlu0 %v1780
        %v1782 = vpop.xlane.xlu0 %1781
        %v1783 = vsel %vm726, %v1773, -inf
        %1784 = vmax.xlane.f32.xlu0 %v1783
        %v1785 = vpop.xlane.xlu0 %1784
        %v1786 = vsub.f32 %v1770, %v1776
        %v1787 = vsub.f32 %v1771, %v1779
        %v1788 = vsub.f32 %v1772, %v1782
        %v1789 = vsub.f32 %v1773, %v1785
        %v1790 = vmul.f32 %v1786, 1.442695
        %v1791 = vpow.pop %v1790
        %v1792 = vmul.f32 %v1787, 1.442695
        %v1793 = vpow.pop %v1792
        %v1794 = vmul.f32 %v1788, 1.442695
        %v1795 = vpow.pop %v1794
        %v1796 = vmul.f32 %v1789, 1.442695
        %v1797 = vpow.pop %v1796
        %v1798 = vsel %vm726, %v1791, 0.0
        %1799 = vadd.xlane.f32.xlu0 %v1798
        %v1800 = vpop.xlane.xlu0 %1799
        %v1801 = vsel %vm726, %v1793, 0.0
        %1802 = vadd.xlane.f32.xlu0 %v1801
        %v1803 = vpop.xlane.xlu0 %1802
        %v1804 = vsel %vm726, %v1795, 0.0
        %1805 = vadd.xlane.f32.xlu0 %v1804
        %v1806 = vpop.xlane.xlu0 %1805
        %v1807 = vsel %vm726, %v1797, 0.0
        %1808 = vadd.xlane.f32.xlu0 %v1807
        %v1809 = vpop.xlane.xlu0 %1808
        %v1810 = vrcp.pop %v1800
        %v1811 = vrcp.pop %v1803
        %v1812 = vrcp.pop %v1806
        %v1813 = vrcp.pop %v1809
        %v1814 = vmul.f32 %v1791, %v1810
        %v1815 = vmul.f32 %v1793, %v1811
        %v1816 = vmul.f32 %v1795, %v1812
        %v1817 = vmul.f32 %v1797, %v1813
        %1818 = vrot.lane.b32.xlu0 %v706, 40
        %v1819 = vpop.permute.xlu0 %1818
        %v1822 = vsel %vm726, %v1814, 0
        %1824 = vmatpush.msra.mxu0 0.0
        %1825 = vmatpush.msra.mxu0 0.0
        %1826 = vmatpush.msra.mxu0 0.0
        %1827 = vmatpush.msra.mxu0 0.0
        %1828 = vmatpush.msra.mxu0 0.0
        %1829 = vmatpush.msra.mxu0 0.0
        %1830 = vmatpush.msra.mxu0 0.0
        %1831 = vmatpush.msra.mxu0 0.0
        %1832 = vmatpush.msra.mxu0 0.0
        %1833 = vmatpush.msra.mxu0 0.0
        %1834 = vmatpush.msra.mxu0 0.0
        %1835 = vmatpush.msra.mxu0 0.0
        %1836 = vmatpush.msra.mxu0 0.0
        %1837 = vmatpush.msra.mxu0 0.0
        %1838 = vmatpush.msra.mxu0 0.0
        %1839 = vmatpush.msra.mxu0 %v1819
        %1840 = vmatmul.f32.gmra.mxu0 %v1822
        %v1841 = vpop.f32.mrf.mxu0
        %v1842 = vadd.f32 0.0, %v1841
        %1843 = vdwg.mxu0
        %1844 = vrot.lane.b32.xlu0 %v709, 40
        %v1845 = vpop.permute.xlu0 %1844
        %v1848 = vsel %vm726, %v1815, 0
        %1850 = vmatpush.msra.mxu0 0.0
        %1851 = vmatpush.msra.mxu0 0.0
        %1852 = vmatpush.msra.mxu0 0.0
        %1853 = vmatpush.msra.mxu0 0.0
        %1854 = vmatpush.msra.mxu0 0.0
        %1855 = vmatpush.msra.mxu0 0.0
        %1856 = vmatpush.msra.mxu0 0.0
        %1857 = vmatpush.msra.mxu0 0.0
        %1858 = vmatpush.msra.mxu0 0.0
        %1859 = vmatpush.msra.mxu0 0.0
        %1860 = vmatpush.msra.mxu0 0.0
        %1861 = vmatpush.msra.mxu0 0.0
        %1862 = vmatpush.msra.mxu0 0.0
        %1863 = vmatpush.msra.mxu0 0.0
        %1864 = vmatpush.msra.mxu0 0.0
        %1865 = vmatpush.msra.mxu0 %v1845
        %1866 = vmatmul.f32.gmra.mxu0 %v1848
        %v1867 = vpop.f32.mrf.mxu0
        %v1868 = vadd.f32 0.0, %v1867
        %1869 = vdwg.mxu0
        %1870 = vrot.lane.b32.xlu0 %v712, 40
        %v1871 = vpop.permute.xlu0 %1870
        %v1874 = vsel %vm726, %v1816, 0
        %1876 = vmatpush.msra.mxu0 0.0
        %1877 = vmatpush.msra.mxu0 0.0
        %1878 = vmatpush.msra.mxu0 0.0
        %1879 = vmatpush.msra.mxu0 0.0
        %1880 = vmatpush.msra.mxu0 0.0
        %1881 = vmatpush.msra.mxu0 0.0
        %1882 = vmatpush.msra.mxu0 0.0
        %1883 = vmatpush.msra.mxu0 0.0
        %1884 = vmatpush.msra.mxu0 0.0
        %1885 = vmatpush.msra.mxu0 0.0
        %1886 = vmatpush.msra.mxu0 0.0
        %1887 = vmatpush.msra.mxu0 0.0
        %1888 = vmatpush.msra.mxu0 0.0
        %1889 = vmatpush.msra.mxu0 0.0
        %1890 = vmatpush.msra.mxu0 0.0
        %1891 = vmatpush.msra.mxu0 %v1871
        %1892 = vmatmul.f32.gmra.mxu0 %v1874
        %v1893 = vpop.f32.mrf.mxu0
        %v1894 = vadd.f32 0.0, %v1893
        %1895 = vdwg.mxu0
        %1896 = vrot.lane.b32.xlu0 %v715, 40
        %v1897 = vpop.permute.xlu0 %1896
        %v1900 = vsel %vm726, %v1817, 0
        %1902 = vmatpush.msra.mxu0 0.0
        %1903 = vmatpush.msra.mxu0 0.0
        %1904 = vmatpush.msra.mxu0 0.0
        %1905 = vmatpush.msra.mxu0 0.0
        %1906 = vmatpush.msra.mxu0 0.0
        %1907 = vmatpush.msra.mxu0 0.0
        %1908 = vmatpush.msra.mxu0 0.0
        %1909 = vmatpush.msra.mxu0 0.0
        %1910 = vmatpush.msra.mxu0 0.0
        %1911 = vmatpush.msra.mxu0 0.0
        %1912 = vmatpush.msra.mxu0 0.0
        %1913 = vmatpush.msra.mxu0 0.0
        %1914 = vmatpush.msra.mxu0 0.0
        %1915 = vmatpush.msra.mxu0 0.0
        %1916 = vmatpush.msra.mxu0 0.0
        %1917 = vmatpush.msra.mxu0 %v1897
        %1918 = vmatmul.f32.gmra.mxu0 %v1900
        %v1919 = vpop.f32.mrf.mxu0
        %v1920 = vadd.f32 0.0, %v1919
        %1921 = vdwg.mxu0
        %v1922 = vld [vmem:[#allocation8 + $0x18] sm:$0xff]
        %v1924 = vsel %vm726, %v1842, 0
        %v1927 = vsel %vm726, %v1868, 0
        %v1930 = vsel %vm726, %v1894, 0
        %v1933 = vsel %vm726, %v1920, 0
        %1935 = vmatpush.msra.mxu0 0.0
        %1936 = vmatpush.msra.mxu0 0.0
        %1937 = vmatpush.msra.mxu0 0.0
        %1938 = vmatpush.msra.mxu0 0.0
        %1939 = vmatpush.msra.mxu0 0.0
        %1940 = vmatpush.msra.mxu0 0.0
        %1941 = vmatpush.msra.mxu0 0.0
        %1942 = vmatpush.msra.mxu0 0.0
        %1943 = vmatpush.msra.mxu0 0.0
        %1944 = vmatpush.msra.mxu0 0.0
        %1945 = vmatpush.msra.mxu0 0.0
        %1946 = vmatpush.msra.mxu0 0.0
        %1947 = vmatpush.msra.mxu0 0.0
        %1948 = vmatpush.msra.mxu0 0.0
        %1949 = vmatpush.msra.mxu0 0.0
        %1950 = vmatpush.msra.mxu0 %v1922
        %1951 = vmatmul.f32.gmra.mxu0 %v1924
        %v1952 = vpop.f32.mrf.mxu0
        %v1953 = vadd.f32 0.0, %v1952
        %1954 = vmatmul.f32.gmra.mxu0 %v1927
        %v1955 = vpop.f32.mrf.mxu0
        %v1956 = vadd.f32 0.0, %v1955
        %1957 = vmatmul.f32.gmra.mxu0 %v1930
        %v1958 = vpop.f32.mrf.mxu0
        %v1959 = vadd.f32 0.0, %v1958
        %1960 = vmatmul.f32.gmra.mxu0 %v1933
        %v1961 = vpop.f32.mrf.mxu0
        %v1962 = vadd.f32 0.0, %v1961
        %1963 = vdwg.mxu0
        %v1964 = vadd.f32 %v1650, %v1953
        %v1965 = vadd.f32 %v1651, %v1956
        %v1966 = vadd.f32 %v1652, %v1959
        %v1967 = vadd.f32 %v1653, %v1962
        %v1968 = vld [vmem:[%s5] sm:$0x1]
        %v1970 = vperm.slane %v1968, 0
        %v1972 = vadd.f32 %v1964, %v1970
        %v1973 = vadd.f32 %v1965, %v1970
        %v1974 = vadd.f32 %v1966, %v1970
        %v1975 = vadd.f32 %v1967, %v1970
        %v1976 = vadd.f32 %v556, %v1972
        %v1977 = vadd.f32 %v557, %v1973
        %v1978 = vadd.f32 %v558, %v1974
        %v1979 = vadd.f32 %v559, %v1975
        %v1980 = vld [vmem:[%s6] sm:$0x1]
        %v1981 = vld [vmem:[%s7] sm:$0x1]
        %v1982 = vsel %vm562, %v1976, 0.0
        %1983 = vadd.xlane.f32.xlu0 %v1982
        %v1984 = vpop.xlane.xlu0 %1983
        %v1985 = vsel %vm562, %v1977, 0.0
        %1986 = vadd.xlane.f32.xlu0 %v1985
        %v1987 = vpop.xlane.xlu0 %1986
        %v1988 = vsel %vm562, %v1978, 0.0
        %1989 = vadd.xlane.f32.xlu0 %v1988
        %v1990 = vpop.xlane.xlu0 %1989
        %v1991 = vsel %vm562, %v1979, 0.0
        %1992 = vadd.xlane.f32.xlu0 %v1991
        %v1993 = vpop.xlane.xlu0 %1992
        %v1994 = vmul.f32 %v1984, %v581
        %v1995 = vmul.f32 %v1987, %v581
        %v1996 = vmul.f32 %v1990, %v581
        %v1997 = vmul.f32 %v1993, %v581
        %v1998 = vsub.f32 %v1976, %v1994
        %v1999 = vsub.f32 %v1977, %v1995
        %v2000 = vsub.f32 %v1978, %v1996
        %v2001 = vsub.f32 %v1979, %v1997
        %v2002 = vmul.f32 %v1998, %v1998
        %v2003 = vmul.f32 %v1999, %v1999
        %v2004 = vmul.f32 %v2000, %v2000
        %v2005 = vmul.f32 %v2001, %v2001
        %v2006 = vsel %vm562, %v2002, 0.0
        %2007 = vadd.xlane.f32.xlu0 %v2006
        %v2008 = vpop.xlane.xlu0 %2007
        %v2009 = vsel %vm562, %v2003, 0.0
        %2010 = vadd.xlane.f32.xlu0 %v2009
        %v2011 = vpop.xlane.xlu0 %2010
        %v2012 = vsel %vm562, %v2004, 0.0
        %2013 = vadd.xlane.f32.xlu0 %v2012
        %v2014 = vpop.xlane.xlu0 %2013
        %v2015 = vsel %vm562, %v2005, 0.0
        %2016 = vadd.xlane.f32.xlu0 %v2015
        %v2017 = vpop.xlane.xlu0 %2016
        %v2018 = vmul.f32 %v2008, %v581
        %v2019 = vmul.f32 %v2011, %v581
        %v2020 = vmul.f32 %v2014, %v581
        %v2021 = vmul.f32 %v2017, %v581
        %v2022 = vadd.f32 %v2018, 1e-05
        %v2023 = vadd.f32 %v2019, 1e-05
        %v2024 = vadd.f32 %v2020, 1e-05
        %v2025 = vadd.f32 %v2021, 1e-05
        %v2026 = vrsqrt.pop %v2022
        %v2027 = vmul.f32 %v2026, %v2022
        %v2028 = vmul.f32 %v2027, %v2026
        %v2029 = vmul.f32 0.5, %v2028
        %v2030 = vsub.f32 1.5, %v2029
        %v2031 = vmul.f32 %v2026, %v2030
        %vm2032 = vweird.f32 %v2022
        %vm2033 = vweird.f32 %v2026
        %vm2034 = vmor %vm2032, %vm2033
        %v2035 = vsel %vm2034, %v2026, %v2031
        %v2036 = vrsqrt.pop %v2023
        %v2037 = vmul.f32 %v2036, %v2023
        %v2038 = vmul.f32 %v2037, %v2036
        %v2039 = vmul.f32 0.5, %v2038
        %v2040 = vsub.f32 1.5, %v2039
        %v2041 = vmul.f32 %v2036, %v2040
        %vm2042 = vweird.f32 %v2023
        %vm2043 = vweird.f32 %v2036
        %vm2044 = vmor %vm2042, %vm2043
        %v2045 = vsel %vm2044, %v2036, %v2041
        %v2046 = vrsqrt.pop %v2024
        %v2047 = vmul.f32 %v2046, %v2024
        %v2048 = vmul.f32 %v2047, %v2046
        %v2049 = vmul.f32 0.5, %v2048
        %v2050 = vsub.f32 1.5, %v2049
        %v2051 = vmul.f32 %v2046, %v2050
        %vm2052 = vweird.f32 %v2024
        %vm2053 = vweird.f32 %v2046
        %vm2054 = vmor %vm2052, %vm2053
        %v2055 = vsel %vm2054, %v2046, %v2051
        %v2056 = vrsqrt.pop %v2025
        %v2057 = vmul.f32 %v2056, %v2025
        %v2058 = vmul.f32 %v2057, %v2056
        %v2059 = vmul.f32 0.5, %v2058
        %v2060 = vsub.f32 1.5, %v2059
        %v2061 = vmul.f32 %v2056, %v2060
        %vm2062 = vweird.f32 %v2025
        %vm2063 = vweird.f32 %v2056
        %vm2064 = vmor %vm2062, %vm2063
        %v2065 = vsel %vm2064, %v2056, %v2061
        %v2066 = vmul.f32 %v1998, %v2035
        %v2067 = vmul.f32 %v1999, %v2045
        %v2068 = vmul.f32 %v2000, %v2055
        %v2069 = vmul.f32 %v2001, %v2065
        %v2071 = vperm.slane %v1980, 0
        %v2073 = vmul.f32 %v2066, %v2071
        %v2074 = vmul.f32 %v2067, %v2071
        %v2075 = vmul.f32 %v2068, %v2071
        %v2076 = vmul.f32 %v2069, %v2071
        %v2078 = vperm.slane %v1981, 0
        %v2080 = vadd.f32 %v2073, %v2078
        %v2081 = vadd.f32 %v2074, %v2078
        %v2082 = vadd.f32 %v2075, %v2078
        %v2083 = vadd.f32 %v2076, %v2078
        %v2084 = vld [vmem:[#allocation10] sm:$0xff]
        %v2085 = vld [vmem:[#allocation10 + $0x8] sm:$0xff]
        %v2086 = vld [vmem:[#allocation10 + $0x10] sm:$0xff]
        %v2087 = vld [vmem:[#allocation10 + $0x18] sm:$0xff]
        %v2088 = vld [vmem:[%s9] sm:$0x1]
        %v2090 = vperm.slane %v2088, 0
        %v2093 = vsel %vm562, %v2080, 0
        %v2096 = vsel %vm562, %v2081, 0
        %v2099 = vsel %vm562, %v2082, 0
        %v2102 = vsel %vm562, %v2083, 0
        %2104 = vmatpush.msra.mxu0 0.0
        %2105 = vmatpush.msra.mxu0 0.0
        %2106 = vmatpush.msra.mxu0 0.0
        %2107 = vmatpush.msra.mxu0 0.0
        %2108 = vmatpush.msra.mxu0 0.0
        %2109 = vmatpush.msra.mxu0 0.0
        %2110 = vmatpush.msra.mxu0 0.0
        %2111 = vmatpush.msra.mxu0 0.0
        %2112 = vmatpush.msra.mxu0 0.0
        %2113 = vmatpush.msra.mxu0 0.0
        %2114 = vmatpush.msra.mxu0 0.0
        %2115 = vmatpush.msra.mxu0 0.0
        %2116 = vmatpush.msra.mxu0 %v2087
        %2117 = vmatpush.msra.mxu0 %v2086
        %2118 = vmatpush.msra.mxu0 %v2085
        %2119 = vmatpush.msra.mxu0 %v2084
        %2120 = vmatmul.f32.gmra.mxu0 %v2093
        %v2121 = vpop.f32.mrf.mxu0
        %v2122 = vadd.f32 %v2090, %v2121
        %2123 = vmatmul.f32.gmra.mxu0 %v2096
        %v2124 = vpop.f32.mrf.mxu0
        %v2125 = vadd.f32 %v2090, %v2124
        %2126 = vmatmul.f32.gmra.mxu0 %v2099
        %v2127 = vpop.f32.mrf.mxu0
        %v2128 = vadd.f32 %v2090, %v2127
        %2129 = vmatmul.f32.gmra.mxu0 %v2102
        %v2130 = vpop.f32.mrf.mxu0
        %v2131 = vadd.f32 %v2090, %v2130
        %2132 = vdwg.mxu0
        %v2133 = vmax.f32 %v2122, 0.0
        %v2134 = vmax.f32 %v2125, 0.0
        %v2135 = vmax.f32 %v2128, 0.0
        %v2136 = vmax.f32 %v2131, 0.0
        %v2137 = vld [vmem:[#allocation11] sm:$0xff]
        %v2138 = vld [vmem:[#allocation11 + $0x8] sm:$0xff]
        %v2139 = vld [vmem:[#allocation11 + $0x10] sm:$0xff]
        %v2140 = vld [vmem:[#allocation11 + $0x18] sm:$0xff]
        %v2141 = vld [vmem:[%s11] sm:$0x1]
        %v2143 = vperm.slane %v2141, 0
        %v2146 = vsel %vm562, %v2133, 0
        %v2149 = vsel %vm562, %v2134, 0
        %v2152 = vsel %vm562, %v2135, 0
        %v2155 = vsel %vm562, %v2136, 0
        %2157 = vmatpush.msra.mxu0 0.0
        %2158 = vmatpush.msra.mxu0 0.0
        %2159 = vmatpush.msra.mxu0 0.0
        %2160 = vmatpush.msra.mxu0 0.0
        %2161 = vmatpush.msra.mxu0 0.0
        %2162 = vmatpush.msra.mxu0 0.0
        %2163 = vmatpush.msra.mxu0 0.0
        %2164 = vmatpush.msra.mxu0 0.0
        %2165 = vmatpush.msra.mxu0 0.0
        %2166 = vmatpush.msra.mxu0 0.0
        %2167 = vmatpush.msra.mxu0 0.0
        %2168 = vmatpush.msra.mxu0 0.0
        %2169 = vmatpush.msra.mxu0 %v2140
        %2170 = vmatpush.msra.mxu0 %v2139
        %2171 = vmatpush.msra.mxu0 %v2138
        %2172 = vmatpush.msra.mxu0 %v2137
        %2173 = vmatmul.f32.gmra.mxu0 %v2146
        %v2174 = vpop.f32.mrf.mxu0
        %v2175 = vadd.f32 %v2143, %v2174
        %2176 = vmatmul.f32.gmra.mxu0 %v2149
        %v2177 = vpop.f32.mrf.mxu0
        %v2178 = vadd.f32 %v2143, %v2177
        %2179 = vmatmul.f32.gmra.mxu0 %v2152
        %v2180 = vpop.f32.mrf.mxu0
        %v2181 = vadd.f32 %v2143, %v2180
        %2182 = vmatmul.f32.gmra.mxu0 %v2155
        %v2183 = vpop.f32.mrf.mxu0
        %v2184 = vadd.f32 %v2143, %v2183
        %2185 = vdwg.mxu0
        %v2186 = vadd.f32 %v1976, %v2175
        %v2187 = vadd.f32 %v1977, %v2178
        %v2188 = vadd.f32 %v1978, %v2181
        %v2189 = vadd.f32 %v1979, %v2184
        %2190 = vst.msk [vmem:[%s545] sm:$0xff] %vm562, %v2186
        %2191 = vst.msk [vmem:[%s545 + $0x8] sm:$0xff] %vm562, %v2187
        %2192 = vst.msk [vmem:[%s545 + $0x10] sm:$0xff] %vm562, %v2188
        %2193 = vst.msk [vmem:[%s545 + $0x18] sm:$0xff] %vm562, %v2189
        %2194 = vst.msk [vmem:[%s552] sm:$0xff] %vm726, %v880
        %2195 = vst.msk [vmem:[%s552 + $0x8] sm:$0xff] %vm726, %v1149
        %2196 = vst.msk [vmem:[%s552 + $0x10] sm:$0xff] %vm726, %v1500
        %2197 = vst.msk [vmem:[%s552 + $0x18] sm:$0xff] %vm726, %v1814
        %2198 = vst.msk [vmem:[%s552 + $0x20] sm:$0xff] %vm726, %v881
        %2199 = vst.msk [vmem:[%s552 + $0x28] sm:$0xff] %vm726, %v1150
        %2200 = vst.msk [vmem:[%s552 + $0x30] sm:$0xff] %vm726, %v1501
        %2201 = vst.msk [vmem:[%s552 + $0x38] sm:$0xff] %vm726, %v1815
        %2202 = vst.msk [vmem:[%s552 + $0x40] sm:$0xff] %vm726, %v882
        %2203 = vst.msk [vmem:[%s552 + $0x48] sm:$0xff] %vm726, %v1151
        %2204 = vst.msk [vmem:[%s552 + $0x50] sm:$0xff] %vm726, %v1502
        %2205 = vst.msk [vmem:[%s552 + $0x58] sm:$0xff] %vm726, %v1816
        %2206 = vst.msk [vmem:[%s552 + $0x60] sm:$0xff] %vm726, %v883
        %2207 = vst.msk [vmem:[%s552 + $0x68] sm:$0xff] %vm726, %v1152
        %2208 = vst.msk [vmem:[%s552 + $0x70] sm:$0xff] %vm726, %v1503
        %2209 = vst.msk [vmem:[%s552 + $0x78] sm:$0xff] %vm726, %v1817
        %s2210 = sand.u32 %s302, 1
        %s2211 = scalar_lea.sflag [#allocation4], %s2210
        %s2212 = sand.u32 %s302, 1
        %s2213 = smul.addr %s2212, 32
        %s2214 = scalar_lea.vmem [#allocation13], %s2213
        %s2215 = sand.u32 %s328, 1
        %s2216 = scalar_lea.sflag [#allocation15], %s2215
        %s2217 = sand.u32 %s328, 1
        %s2218 = smul.addr %s2217, 128
        %s2219 = scalar_lea.vmem [#allocation14], %s2218
        // Predicated region
        $region93: #{tpu_custom_call.1} parent=67 // pred_check
          %p2220 = pneg %p312
        $region94: #{tpu_custom_call.1} parent=67 // pred_check_branch
          %2222 = sbr.rel (%p2220) target = $region96
        $region95: #{tpu_custom_call.1} parent=67 // pred_region
          %s2223 = smul.u32 4, %s37
          %2225 = vsyncadd %s2211, 0
          %s2226 = smul.addr %s2223, 8
          %s2227 = scalar_lea.hbm %s12, %s2226
          %s2228 = sshll.u32 %s2214, 4
          %s2229 = int_to_ptr.vmem [resolvable:$true] %s2228
          %s2230 = sshll.u32 %s2227, 4
          %s2231 = int_to_ptr.hbm [resolvable:$true] %s2230
          %2236 = dma.vmem_to_hbm [thread:$0]  %s2229, 512, %s2231, %s2211, 128, 128, 8
        $region96: #{tpu_custom_call.1} parent=67 // pred_fallthru
          _
        // Predicated region
        $region97: #{tpu_custom_call.1} parent=67 // pred_check
          %p2237 = pneg %p338
        $region98: #{tpu_custom_call.1} parent=67 // pred_check_branch
          %2239 = sbr.rel (%p2237) target = $region100
        $region99: #{tpu_custom_call.1} parent=67 // pred_region
          %s2240 = smul.u32 4, %s37
          %2242 = vsyncadd %s2216, 0
          %s2243 = smul.addr %s2240, 4
          %s2244 = smul.addr %s2243, 8
          %s2245 = scalar_lea.hbm %s13, %s2244
          %s2246 = sshll.u32 %s2219, 4
          %s2247 = int_to_ptr.vmem [resolvable:$true] %s2246
          %s2248 = sshll.u32 %s2245, 4
          %s2249 = int_to_ptr.hbm [resolvable:$true] %s2248
          %2254 = dma.vmem_to_hbm [thread:$0]  %s2247, 2048, %s2249, %s2216, 128, 128, 8
        $region100: #{tpu_custom_call.1} parent=67 // pred_fallthru
          _
      $region68: #{tpu_custom_call.1} parent=5 // pred_fallthru
        _
      %p2255 = scmp.le.s32.totalorder 2, %s32
      // Predicated region
      $region101: #{tpu_custom_call.1} parent=5 // pred_check
        %p2256 = pneg %p2255
      $region102: #{tpu_custom_call.1} parent=5 // pred_check_branch
        %2258 = sbr.rel (%p2256) target = $region104
      $region103: #{tpu_custom_call.1} parent=5 // pred_region
        %s2259 = ssub.s32 %s32, 2
        // Predicated region
        $region105: #{tpu_custom_call.1} parent=103 // pred_check
          %p2260 = pneg %p318
        $region106: #{tpu_custom_call.1} parent=103 // pred_check_branch
          %2262 = sbr.rel (%p2260) target = $region108
        $region107: #{tpu_custom_call.1} parent=103 // pred_region
          %s2263 = sand.u32 %s303, 1
          %s2264 = scalar_lea.sflag [#allocation4], %s2263
          %s2265 = sand.u32 %s303, 1
          %s2266 = smul.addr %s2265, 32
          %s2267 = scalar_lea.vmem [#allocation13], %s2266
          %2269 = dma.done %s2264, 512
        $region108: #{tpu_custom_call.1} parent=103 // pred_fallthru
          _
        // Predicated region
        $region109: #{tpu_custom_call.1} parent=103 // pred_check
          %p2270 = pneg %p344
        $region110: #{tpu_custom_call.1} parent=103 // pred_check_branch
          %2272 = sbr.rel (%p2270) target = $region112
        $region111: #{tpu_custom_call.1} parent=103 // pred_region
          %s2273 = sand.u32 %s329, 1
          %s2274 = scalar_lea.sflag [#allocation15], %s2273
          %s2275 = sand.u32 %s329, 1
          %s2276 = smul.addr %s2275, 128
          %s2277 = scalar_lea.vmem [#allocation14], %s2276
          %2279 = dma.done %s2274, 2048
        $region112: #{tpu_custom_call.1} parent=103 // pred_fallthru
          _
      $region104: #{tpu_custom_call.1} parent=5 // pred_fallthru
        _
    $region6: #{tpu_custom_call.1} parent=1 // loop_footer
      %s36 = sadd.s32 1, %s32
    $region7: #{tpu_custom_call.1} parent=1 // loop_footer_branch
      %31 = sbr.rel target = $region3
    $region8: #{tpu_custom_call.1} parent=1 // loop_exit
      _
    %2280 = vsyncpa [#allocation3], 1
    %s2281 = scalar_lea.sflag [#allocation3], 1
    %2282 = vsyncpa %s2281, 1
    %2283 = vsyncpa [#allocation6], 1
    %2284 = vsyncpa [#allocation9], 1
    %2285 = vsyncpa [#allocation12], 1
    %2286 = vsyncpa [#allocation4], 1
    %s2287 = scalar_lea.sflag [#allocation4], 1
    %2288 = vsyncpa %s2287, 1
    %2289 = vsyncpa [#allocation15], 1
    %s2290 = scalar_lea.sflag [#allocation15], 1
    %2291 = vsyncpa %s2290, 1

</llo_original>
